<compile_context>
chip_gen: v7x
topology: tpu7x:2x2x1
jax: 0.10.0
libtpu: 0.0.40
codegen_flags: <defaults>
</compile_context>

<pallas_src>
import jax
import jax.numpy as jnp
from jax.experimental import pallas as pl
from jax.experimental.pallas import tpu as pltpu


def encoder_gru_kernel(emb_ref, len_ref,
                       wi_all_ref, bi_all_ref,
                       wh_f_ref, wh_b_ref,
                       bhn_f_ref, bhn_b_ref,
                       wfc_f_ref, wfc_b_ref, bfc_ref,
                       out_f_ref, out_b_ref, hid_ref):
    TB = emb_ref.shape[0]
    B = len_ref.shape[0]
    T = TB // B
    H = wh_f_ref.shape[0]

    # ---- phase 1: hoisted input projection (time & h independent) ----
    # One big MXU matmul for all timesteps and BOTH directions:
    # (T*B, E) @ (E, 6H), bf16 inputs, f32 accumulation.
    gi_all = jnp.dot(emb_ref[...], wi_all_ref[...],
                     preferred_element_type=jnp.float32) + bi_all_ref[...]
    gi_f = gi_all[:, :3 * H]       # forward panels  [r | z | n]
    gi_b = gi_all[:, 3 * H:]       # backward panels [r | z | n]

    # Hoisted out of the recurrence: bf16 recurrent weights, n-gate biases,
    # and all boolean length masks (independent of h -> off critical path).
    wh_f = wh_f_ref[...]           # (H, 3H) bf16
    wh_b = wh_b_ref[...]           # (H, 3H) bf16
    bhn_f = bhn_f_ref[...]         # (1, H)  f32
    bhn_b = bhn_b_ref[...]
    lens = len_ref[...]            # (B, 1) int32
    masks = [lens > t for t in range(T)]   # T x (B, 1) bool

    def gru_step(h, gi, wh_bf16, bhn):
        # ONE recurrent matmul per step per direction (bf16 operands, f32 acc).
        # PyTorch GRU cell, gate order (r, z, n); b_hr/b_hz pre-folded into gi.
        gh = jnp.dot(h.astype(jnp.bfloat16), wh_bf16,
                     preferred_element_type=jnp.float32)           # (B, 3H)
        r = jax.nn.sigmoid(gi[:, :H] + gh[:, :H])
        z = jax.nn.sigmoid(gi[:, H:2 * H] + gh[:, H:2 * H])
        n = jnp.tanh(gi[:, 2 * H:] + r * (gh[:, 2 * H:] + bhn))
        return (1.0 - z) * n + z * h

    h_f = jnp.zeros((B, H), jnp.float32)
    h_b = jnp.zeros((B, H), jnp.float32)

    # ---- phase 2: fully unrolled recurrence, fwd & bwd interleaved ----
    for i in range(T):
        tf = i
        tb = T - 1 - i
        m_f = masks[tf]
        m_b = masks[tb]

        hf_new = gru_step(h_f, gi_f[tf * B:(tf + 1) * B], wh_f, bhn_f)
        hb_new = gru_step(h_b, gi_b[tb * B:(tb + 1) * B], wh_b, bhn_b)

        # Per-step stores (padded steps are written as exact zeros). These are
        # off the serial dependency chain, so they overlap with the next step.
        out_f_ref[pl.ds(tf * B, B), :] = jnp.where(m_f, hf_new, 0.0)
        out_b_ref[pl.ds(tb * B, B), :] = jnp.where(m_b, hb_new, 0.0)

        # Freeze h past the sequence length with a single select per direction.
        h_f = jnp.where(m_f, hf_new, h_f)
        h_b = jnp.where(m_b, hb_new, h_b)

    # ---- phase 3: fc + tanh epilogue (split weights; no lane-axis concat) ----
    hid_ref[...] = jnp.tanh(
        jnp.dot(h_f, wfc_f_ref[...], preferred_element_type=jnp.float32)
        + jnp.dot(h_b, wfc_b_ref[...], preferred_element_type=jnp.float32)
        + bfc_ref[...])


def encoder_forward(x, lengths, params):
    """x: (B, T) int32 token ids, lengths: (B,) int32."""
    B, T = x.shape
    H = params["wh_f"].shape[0]
    D = params["wfc"].shape[1]

    # --- XLA-side glue: time-major embedding gather (no transpose round-trip),
    # dropout = eval-mode identity. ---
    # TODO(synk): training-mode dropout (pltpu.prng_*) not implemented.
    emb2d = jnp.take(params["embed"], x.T.reshape(-1), axis=0).astype(jnp.bfloat16)  # (T*B, E)
    len_col = lengths.astype(jnp.int32)[:, None]                   # (B, 1)

    # Pack input-projection weights for the single hoisted matmul and fold the
    # recurrent r/z biases into it (mathematically identical; b_hn stays apart).
    wi_all = jnp.concatenate([params["wi_f"], params["wi_b"]],
                             axis=1).astype(jnp.bfloat16)          # (E, 6H)
    zH = jnp.zeros((1, H), jnp.float32)
    bi_all = (jnp.concatenate([params["bi_f"], params["bi_b"]], axis=1)
              + jnp.concatenate([params["bh_f"][:, :2 * H], zH,
                                 params["bh_b"][:, :2 * H], zH], axis=1))  # (1, 6H)

    # Whole (H, 3H) recurrent weights per direction, bf16 operands.
    wh_f = params["wh_f"].astype(jnp.bfloat16)
    wh_b = params["wh_b"].astype(jnp.bfloat16)
    bhn_f = params["bh_f"][:, 2 * H:]
    bhn_b = params["bh_b"][:, 2 * H:]

    # Split fc weight so the kernel avoids a lane-axis concat of [h_f, h_b].
    wfc_f = params["wfc"][:H]
    wfc_b = params["wfc"][H:]
    bfc = params["bfc"]

    vspec = lambda: pl.BlockSpec(memory_space=pltpu.MemorySpace.VMEM)
    out_f, out_b, hid = pl.pallas_call(
        encoder_gru_kernel,
        out_shape=(
            jax.ShapeDtypeStruct((T * B, H), jnp.float32),
            jax.ShapeDtypeStruct((T * B, H), jnp.float32),
            jax.ShapeDtypeStruct((B, D), jnp.float32),
        ),
        in_specs=[vspec() for _ in range(11)],
        out_specs=(vspec(), vspec(), vspec()),
        # NOTE: at demo sizes everything is VMEM-resident; for production sizes
        # tile phase 1 as a grid matmul, stream gi over a T grid axis, and set
        # pltpu.CompilerParams(vmem_limit_bytes=...) accordingly.
    )(emb2d, len_col, wi_all, bi_all,
      wh_f, wh_b, bhn_f, bhn_b, wfc_f, wfc_b, bfc)

    out_f = jnp.transpose(out_f.reshape(T, B, H), (1, 0, 2))       # (B, T, H)
    out_b = jnp.transpose(out_b.reshape(T, B, H), (1, 0, 2))       # (B, T, H)
    out = jnp.concatenate([out_f, out_b], axis=-1)                 # (B, T, 2H)
    hid = hid[None, :, :]                                          # (1, B, D)
    return out, hid


def init_params(key, vocab_size, embed_size, enc_hidden, dec_hidden):
    ks = jax.random.split(key, 12)
    H = enc_hidden
    s_e = 1.0
    s_g = 1.0 / jnp.sqrt(H)
    p = {
        "embed": jax.random.normal(ks[0], (vocab_size, embed_size), jnp.float32) * s_e,
        # forward GRU direction (stored transposed: x @ W_ih, h @ W_hh), gate order (r,z,n)
        "wi_f": jax.random.uniform(ks[1], (embed_size, 3 * H), jnp.float32, -s_g, s_g),
        "wh_f": jax.random.uniform(ks[2], (H, 3 * H), jnp.float32, -s_g, s_g),
        "bi_f": jax.random.uniform(ks[3], (1, 3 * H), jnp.float32, -s_g, s_g),
        "bh_f": jax.random.uniform(ks[4], (1, 3 * H), jnp.float32, -s_g, s_g),
        # backward GRU direction
        "wi_b": jax.random.uniform(ks[5], (embed_size, 3 * H), jnp.float32, -s_g, s_g),
        "wh_b": jax.random.uniform(ks[6], (H, 3 * H), jnp.float32, -s_g, s_g),
        "bi_b": jax.random.uniform(ks[7], (1, 3 * H), jnp.float32, -s_g, s_g),
        "bh_b": jax.random.uniform(ks[8], (1, 3 * H), jnp.float32, -s_g, s_g),
        # fc: (2H -> dec_hidden)
        "wfc": jax.random.uniform(ks[9], (2 * H, dec_hidden), jnp.float32, -s_g, s_g),
        "bfc": jax.random.uniform(ks[10], (1, dec_hidden), jnp.float32, -s_g, s_g),
    }
    return p


if __name__ == "__main__":
    VOCAB, EMBED, ENC_H, DEC_H = 50, 32, 32, 32
    B, T = 2, 8

    key = jax.random.PRNGKey(0)
    k_tok, k_par = jax.random.split(key)

    x = jax.random.randint(k_tok, (B, T), 1, VOCAB, dtype=jnp.int32)
    lengths = jnp.array([8, 5], dtype=jnp.int32)    # one full, one padded sequence
    params = init_params(k_par, VOCAB, EMBED, ENC_H, DEC_H)

    out, hid = encoder_forward(x, lengths, params)
    out = jax.block_until_ready(out)
    hid = jax.block_until_ready(hid)

    # pad_packed_sequence pads only up to the max length in the batch.
    max_len = int(jnp.max(lengths))
    out = out[:, :max_len, :]

    assert out.shape == (B, max_len, 2 * ENC_H), out.shape
    assert hid.shape == (1, B, DEC_H), hid.shape
    # padded positions of the shorter sequence must be exactly zero
    assert bool(jnp.all(out[1, int(lengths[1]):, :] == 0.0))
    assert bool(jnp.all(jnp.isfinite(out))) and bool(jnp.all(jnp.isfinite(hid)))

    print("KERNEL_OK")
</pallas_src>

<mosaic_0001>
module attributes {stable_mosaic.version = 11 : i64} {
  func.func @encoder_gru_kernel(%arg0: memref<16x32xbf16, #tpu.memory_space<vmem>>, %arg1: memref<2x1xi32, #tpu.memory_space<vmem>>, %arg2: memref<32x192xbf16, #tpu.memory_space<vmem>>, %arg3: memref<1x192xf32, #tpu.memory_space<vmem>>, %arg4: memref<32x96xbf16, #tpu.memory_space<vmem>>, %arg5: memref<32x96xbf16, #tpu.memory_space<vmem>>, %arg6: memref<1x32xf32, #tpu.memory_space<vmem>>, %arg7: memref<1x32xf32, #tpu.memory_space<vmem>>, %arg8: memref<32x32xf32, #tpu.memory_space<vmem>>, %arg9: memref<32x32xf32, #tpu.memory_space<vmem>>, %arg10: memref<1x32xf32, #tpu.memory_space<vmem>>, %arg11: memref<16x32xf32, #tpu.memory_space<vmem>>, %arg12: memref<16x32xf32, #tpu.memory_space<vmem>>, %arg13: memref<2x32xf32, #tpu.memory_space<vmem>>) attributes {dimension_semantics = [], scalar_prefetch = 0 : i64, scratch_operands = 0 : i64, tpu.core_type = #tpu.core_type<tc>} {
    %c0 = arith.constant 0 : index
    %c0_0 = arith.constant 0 : index
    %0 = vector.load %arg0[%c0, %c0_0] : memref<16x32xbf16, #tpu.memory_space<vmem>>, vector<16x32xbf16>
    %c0_1 = arith.constant 0 : index
    %c0_2 = arith.constant 0 : index
    %1 = vector.load %arg2[%c0_1, %c0_2] : memref<32x192xbf16, #tpu.memory_space<vmem>>, vector<32x192xbf16>
    %cst = arith.constant dense<0.000000e+00> : vector<16x192xf32>
    %2 = tpu.matmul %0, %1, %cst {dimension_numbers = #tpu.dot_dimension_numbers<[1], [0], [0], [1], [0, 0, 1, 1], [], []>} : vector<16x32xbf16>, vector<32x192xbf16>, vector<16x192xf32> -> vector<16x192xf32>
    %c0_3 = arith.constant 0 : index
    %c0_4 = arith.constant 0 : index
    %3 = vector.load %arg3[%c0_3, %c0_4] : memref<1x192xf32, #tpu.memory_space<vmem>>, vector<1x192xf32>
    %4 = vector.broadcast %3 : vector<1x192xf32> to vector<16x192xf32>
    %5 = arith.addf %2, %4 : vector<16x192xf32>
    %6 = vector.extract_strided_slice %5 {offsets = [0, 0], sizes = [16, 96], strides = [1, 1]} : vector<16x192xf32> to vector<16x96xf32>
    %7 = vector.extract_strided_slice %5 {offsets = [0, 96], sizes = [16, 96], strides = [1, 1]} : vector<16x192xf32> to vector<16x96xf32>
    %c0_5 = arith.constant 0 : index
    %c0_6 = arith.constant 0 : index
    %8 = vector.load %arg4[%c0_5, %c0_6] : memref<32x96xbf16, #tpu.memory_space<vmem>>, vector<32x96xbf16>
    %c0_7 = arith.constant 0 : index
    %c0_8 = arith.constant 0 : index
    %9 = vector.load %arg5[%c0_7, %c0_8] : memref<32x96xbf16, #tpu.memory_space<vmem>>, vector<32x96xbf16>
    %c0_9 = arith.constant 0 : index
    %c0_10 = arith.constant 0 : index
    %10 = vector.load %arg6[%c0_9, %c0_10] : memref<1x32xf32, #tpu.memory_space<vmem>>, vector<1x32xf32>
    %c0_11 = arith.constant 0 : index
    %c0_12 = arith.constant 0 : index
    %11 = vector.load %arg7[%c0_11, %c0_12] : memref<1x32xf32, #tpu.memory_space<vmem>>, vector<1x32xf32>
    %c0_13 = arith.constant 0 : index
    %c0_14 = arith.constant 0 : index
    %12 = vector.load %arg1[%c0_13, %c0_14] : memref<2x1xi32, #tpu.memory_space<vmem>>, vector<2x1xi32>
    %c0_i32 = arith.constant 0 : i32
    %13 = vector.broadcast %c0_i32 : i32 to vector<2x1xi32>
    %14 = arith.cmpi sgt, %12, %13 : vector<2x1xi32>
    %c1_i32 = arith.constant 1 : i32
    %15 = vector.broadcast %c1_i32 : i32 to vector<2x1xi32>
    %16 = arith.cmpi sgt, %12, %15 : vector<2x1xi32>
    %c2_i32 = arith.constant 2 : i32
    %17 = vector.broadcast %c2_i32 : i32 to vector<2x1xi32>
    %18 = arith.cmpi sgt, %12, %17 : vector<2x1xi32>
    %c3_i32 = arith.constant 3 : i32
    %19 = vector.broadcast %c3_i32 : i32 to vector<2x1xi32>
    %20 = arith.cmpi sgt, %12, %19 : vector<2x1xi32>
    %c4_i32 = arith.constant 4 : i32
    %21 = vector.broadcast %c4_i32 : i32 to vector<2x1xi32>
    %22 = arith.cmpi sgt, %12, %21 : vector<2x1xi32>
    %c5_i32 = arith.constant 5 : i32
    %23 = vector.broadcast %c5_i32 : i32 to vector<2x1xi32>
    %24 = arith.cmpi sgt, %12, %23 : vector<2x1xi32>
    %c6_i32 = arith.constant 6 : i32
    %25 = vector.broadcast %c6_i32 : i32 to vector<2x1xi32>
    %26 = arith.cmpi sgt, %12, %25 : vector<2x1xi32>
    %c7_i32 = arith.constant 7 : i32
    %27 = vector.broadcast %c7_i32 : i32 to vector<2x1xi32>
    %28 = arith.cmpi sgt, %12, %27 : vector<2x1xi32>
    %cst_15 = arith.constant 0.000000e+00 : f32
    %29 = vector.broadcast %cst_15 : f32 to vector<2x32xf32>
    %cst_16 = arith.constant 0.000000e+00 : f32
    %30 = vector.broadcast %cst_16 : f32 to vector<2x32xf32>
    %31 = vector.extract_strided_slice %6 {offsets = [0, 0], sizes = [2, 96], strides = [1, 1]} : vector<16x96xf32> to vector<2x96xf32>
    %32 = arith.truncf %29 : vector<2x32xf32> to vector<2x32xbf16>
    %cst_17 = arith.constant dense<0.000000e+00> : vector<2x96xf32>
    %33 = tpu.matmul %32, %8, %cst_17 {dimension_numbers = #tpu.dot_dimension_numbers<[1], [0], [0], [1], [0, 0, 1, 1], [], []>} : vector<2x32xbf16>, vector<32x96xbf16>, vector<2x96xf32> -> vector<2x96xf32>
    %34 = vector.extract_strided_slice %31 {offsets = [0, 0], sizes = [2, 32], strides = [1, 1]} : vector<2x96xf32> to vector<2x32xf32>
    %35 = vector.extract_strided_slice %33 {offsets = [0, 0], sizes = [2, 32], strides = [1, 1]} : vector<2x96xf32> to vector<2x32xf32>
    %36 = arith.addf %34, %35 : vector<2x32xf32>
    %37 = arith.negf %36 : vector<2x32xf32>
    %38 = math.exp %37 : vector<2x32xf32>
    %cst_18 = arith.constant 1.000000e+00 : f32
    %39 = vector.broadcast %cst_18 : f32 to vector<2x32xf32>
    %40 = arith.addf %39, %38 : vector<2x32xf32>
    %41 = arith.divf %39, %40 : vector<2x32xf32>
    %42 = vector.extract_strided_slice %31 {offsets = [0, 32], sizes = [2, 32], strides = [1, 1]} : vector<2x96xf32> to vector<2x32xf32>
    %43 = vector.extract_strided_slice %33 {offsets = [0, 32], sizes = [2, 32], strides = [1, 1]} : vector<2x96xf32> to vector<2x32xf32>
    %44 = arith.addf %42, %43 : vector<2x32xf32>
    %45 = arith.negf %44 : vector<2x32xf32>
    %46 = math.exp %45 : vector<2x32xf32>
    %cst_19 = arith.constant 1.000000e+00 : f32
    %47 = vector.broadcast %cst_19 : f32 to vector<2x32xf32>
    %48 = arith.addf %47, %46 : vector<2x32xf32>
    %49 = arith.divf %47, %48 : vector<2x32xf32>
    %50 = vector.extract_strided_slice %31 {offsets = [0, 64], sizes = [2, 32], strides = [1, 1]} : vector<2x96xf32> to vector<2x32xf32>
    %51 = vector.extract_strided_slice %33 {offsets = [0, 64], sizes = [2, 32], strides = [1, 1]} : vector<2x96xf32> to vector<2x32xf32>
    %52 = vector.broadcast %10 : vector<1x32xf32> to vector<2x32xf32>
    %53 = arith.addf %51, %52 : vector<2x32xf32>
    %54 = arith.mulf %41, %53 : vector<2x32xf32>
    %55 = arith.addf %50, %54 : vector<2x32xf32>
    %56 = math.tanh %55 : vector<2x32xf32>
    %cst_20 = arith.constant 1.000000e+00 : f32
    %57 = vector.broadcast %cst_20 : f32 to vector<2x32xf32>
    %58 = arith.subf %57, %49 : vector<2x32xf32>
    %59 = arith.mulf %58, %56 : vector<2x32xf32>
    %60 = arith.mulf %49, %29 : vector<2x32xf32>
    %61 = arith.addf %59, %60 : vector<2x32xf32>
    %62 = vector.extract_strided_slice %7 {offsets = [14, 0], sizes = [2, 96], strides = [1, 1]} : vector<16x96xf32> to vector<2x96xf32>
    %63 = arith.truncf %30 : vector<2x32xf32> to vector<2x32xbf16>
    %cst_21 = arith.constant dense<0.000000e+00> : vector<2x96xf32>
    %64 = tpu.matmul %63, %9, %cst_21 {dimension_numbers = #tpu.dot_dimension_numbers<[1], [0], [0], [1], [0, 0, 1, 1], [], []>} : vector<2x32xbf16>, vector<32x96xbf16>, vector<2x96xf32> -> vector<2x96xf32>
    %65 = vector.extract_strided_slice %62 {offsets = [0, 0], sizes = [2, 32], strides = [1, 1]} : vector<2x96xf32> to vector<2x32xf32>
    %66 = vector.extract_strided_slice %64 {offsets = [0, 0], sizes = [2, 32], strides = [1, 1]} : vector<2x96xf32> to vector<2x32xf32>
    %67 = arith.addf %65, %66 : vector<2x32xf32>
    %68 = arith.negf %67 : vector<2x32xf32>
    %69 = math.exp %68 : vector<2x32xf32>
    %cst_22 = arith.constant 1.000000e+00 : f32
    %70 = vector.broadcast %cst_22 : f32 to vector<2x32xf32>
    %71 = arith.addf %70, %69 : vector<2x32xf32>
    %72 = arith.divf %70, %71 : vector<2x32xf32>
    %73 = vector.extract_strided_slice %62 {offsets = [0, 32], sizes = [2, 32], strides = [1, 1]} : vector<2x96xf32> to vector<2x32xf32>
    %74 = vector.extract_strided_slice %64 {offsets = [0, 32], sizes = [2, 32], strides = [1, 1]} : vector<2x96xf32> to vector<2x32xf32>
    %75 = arith.addf %73, %74 : vector<2x32xf32>
    %76 = arith.negf %75 : vector<2x32xf32>
    %77 = math.exp %76 : vector<2x32xf32>
    %cst_23 = arith.constant 1.000000e+00 : f32
    %78 = vector.broadcast %cst_23 : f32 to vector<2x32xf32>
    %79 = arith.addf %78, %77 : vector<2x32xf32>
    %80 = arith.divf %78, %79 : vector<2x32xf32>
    %81 = vector.extract_strided_slice %62 {offsets = [0, 64], sizes = [2, 32], strides = [1, 1]} : vector<2x96xf32> to vector<2x32xf32>
    %82 = vector.extract_strided_slice %64 {offsets = [0, 64], sizes = [2, 32], strides = [1, 1]} : vector<2x96xf32> to vector<2x32xf32>
    %83 = vector.broadcast %11 : vector<1x32xf32> to vector<2x32xf32>
    %84 = arith.addf %82, %83 : vector<2x32xf32>
    %85 = arith.mulf %72, %84 : vector<2x32xf32>
    %86 = arith.addf %81, %85 : vector<2x32xf32>
    %87 = math.tanh %86 : vector<2x32xf32>
    %cst_24 = arith.constant 1.000000e+00 : f32
    %88 = vector.broadcast %cst_24 : f32 to vector<2x32xf32>
    %89 = arith.subf %88, %80 : vector<2x32xf32>
    %90 = arith.mulf %89, %87 : vector<2x32xf32>
    %91 = arith.mulf %80, %30 : vector<2x32xf32>
    %92 = arith.addf %90, %91 : vector<2x32xf32>
    %cst_25 = arith.constant 0.000000e+00 : f32
    %93 = vector.shape_cast %14 : vector<2x1xi1> to vector<2x1xi1>
    %94 = vector.broadcast %93 : vector<2x1xi1> to vector<2x32xi1>
    %95 = vector.broadcast %cst_25 : f32 to vector<2x32xf32>
    %96 = arith.select %94, %61, %95 : vector<2x32xi1>, vector<2x32xf32>
    %c0_26 = arith.constant 0 : index
    %c0_27 = arith.constant 0 : index
    %97 = vector.load %arg11[%c0_26, %c0_27] : memref<16x32xf32, #tpu.memory_space<vmem>>, vector<2x32xf32>
    tpu.vector_store %arg11[%c0_26, %c0_27], %96 {strides = array<i32>} : memref<16x32xf32, #tpu.memory_space<vmem>>, vector<2x32xf32>,
    %cst_28 = arith.constant 0.000000e+00 : f32
    %98 = vector.shape_cast %28 : vector<2x1xi1> to vector<2x1xi1>
    %99 = vector.broadcast %98 : vector<2x1xi1> to vector<2x32xi1>
    %100 = vector.broadcast %cst_28 : f32 to vector<2x32xf32>
    %101 = arith.select %99, %92, %100 : vector<2x32xi1>, vector<2x32xf32>
    %c14 = arith.constant 14 : index
    %c0_29 = arith.constant 0 : index
    %102 = vector.load %arg12[%c14, %c0_29] : memref<16x32xf32, #tpu.memory_space<vmem>>, vector<2x32xf32>
    tpu.vector_store %arg12[%c14, %c0_29], %101 {strides = array<i32>} : memref<16x32xf32, #tpu.memory_space<vmem>>, vector<2x32xf32>,
    %103 = vector.shape_cast %14 : vector<2x1xi1> to vector<2x1xi1>
    %104 = vector.broadcast %103 : vector<2x1xi1> to vector<2x32xi1>
    %105 = arith.select %104, %61, %29 : vector<2x32xi1>, vector<2x32xf32>
    %106 = vector.shape_cast %28 : vector<2x1xi1> to vector<2x1xi1>
    %107 = vector.broadcast %106 : vector<2x1xi1> to vector<2x32xi1>
    %108 = arith.select %107, %92, %30 : vector<2x32xi1>, vector<2x32xf32>
    %109 = vector.extract_strided_slice %6 {offsets = [2, 0], sizes = [2, 96], strides = [1, 1]} : vector<16x96xf32> to vector<2x96xf32>
    %110 = arith.truncf %105 : vector<2x32xf32> to vector<2x32xbf16>
    %cst_30 = arith.constant dense<0.000000e+00> : vector<2x96xf32>
    %111 = tpu.matmul %110, %8, %cst_30 {dimension_numbers = #tpu.dot_dimension_numbers<[1], [0], [0], [1], [0, 0, 1, 1], [], []>} : vector<2x32xbf16>, vector<32x96xbf16>, vector<2x96xf32> -> vector<2x96xf32>
    %112 = vector.extract_strided_slice %109 {offsets = [0, 0], sizes = [2, 32], strides = [1, 1]} : vector<2x96xf32> to vector<2x32xf32>
    %113 = vector.extract_strided_slice %111 {offsets = [0, 0], sizes = [2, 32], strides = [1, 1]} : vector<2x96xf32> to vector<2x32xf32>
    %114 = arith.addf %112, %113 : vector<2x32xf32>
    %115 = arith.negf %114 : vector<2x32xf32>
    %116 = math.exp %115 : vector<2x32xf32>
    %cst_31 = arith.constant 1.000000e+00 : f32
    %117 = vector.broadcast %cst_31 : f32 to vector<2x32xf32>
    %118 = arith.addf %117, %116 : vector<2x32xf32>
    %119 = arith.divf %117, %118 : vector<2x32xf32>
    %120 = vector.extract_strided_slice %109 {offsets = [0, 32], sizes = [2, 32], strides = [1, 1]} : vector<2x96xf32> to vector<2x32xf32>
    %121 = vector.extract_strided_slice %111 {offsets = [0, 32], sizes = [2, 32], strides = [1, 1]} : vector<2x96xf32> to vector<2x32xf32>
    %122 = arith.addf %120, %121 : vector<2x32xf32>
    %123 = arith.negf %122 : vector<2x32xf32>
    %124 = math.exp %123 : vector<2x32xf32>
    %cst_32 = arith.constant 1.000000e+00 : f32
    %125 = vector.broadcast %cst_32 : f32 to vector<2x32xf32>
    %126 = arith.addf %125, %124 : vector<2x32xf32>
    %127 = arith.divf %125, %126 : vector<2x32xf32>
    %128 = vector.extract_strided_slice %109 {offsets = [0, 64], sizes = [2, 32], strides = [1, 1]} : vector<2x96xf32> to vector<2x32xf32>
    %129 = vector.extract_strided_slice %111 {offsets = [0, 64], sizes = [2, 32], strides = [1, 1]} : vector<2x96xf32> to vector<2x32xf32>
    %130 = vector.broadcast %10 : vector<1x32xf32> to vector<2x32xf32>
    %131 = arith.addf %129, %130 : vector<2x32xf32>
    %132 = arith.mulf %119, %131 : vector<2x32xf32>
    %133 = arith.addf %128, %132 : vector<2x32xf32>
    %134 = math.tanh %133 : vector<2x32xf32>
    %cst_33 = arith.constant 1.000000e+00 : f32
    %135 = vector.broadcast %cst_33 : f32 to vector<2x32xf32>
    %136 = arith.subf %135, %127 : vector<2x32xf32>
    %137 = arith.mulf %136, %134 : vector<2x32xf32>
    %138 = arith.mulf %127, %105 : vector<2x32xf32>
    %139 = arith.addf %137, %138 : vector<2x32xf32>
    %140 = vector.extract_strided_slice %7 {offsets = [12, 0], sizes = [2, 96], strides = [1, 1]} : vector<16x96xf32> to vector<2x96xf32>
    %141 = arith.truncf %108 : vector<2x32xf32> to vector<2x32xbf16>
    %cst_34 = arith.constant dense<0.000000e+00> : vector<2x96xf32>
    %142 = tpu.matmul %141, %9, %cst_34 {dimension_numbers = #tpu.dot_dimension_numbers<[1], [0], [0], [1], [0, 0, 1, 1], [], []>} : vector<2x32xbf16>, vector<32x96xbf16>, vector<2x96xf32> -> vector<2x96xf32>
    %143 = vector.extract_strided_slice %140 {offsets = [0, 0], sizes = [2, 32], strides = [1, 1]} : vector<2x96xf32> to vector<2x32xf32>
    %144 = vector.extract_strided_slice %142 {offsets = [0, 0], sizes = [2, 32], strides = [1, 1]} : vector<2x96xf32> to vector<2x32xf32>
    %145 = arith.addf %143, %144 : vector<2x32xf32>
    %146 = arith.negf %145 : vector<2x32xf32>
    %147 = math.exp %146 : vector<2x32xf32>
    %cst_35 = arith.constant 1.000000e+00 : f32
    %148 = vector.broadcast %cst_35 : f32 to vector<2x32xf32>
    %149 = arith.addf %148, %147 : vector<2x32xf32>
    %150 = arith.divf %148, %149 : vector<2x32xf32>
    %151 = vector.extract_strided_slice %140 {offsets = [0, 32], sizes = [2, 32], strides = [1, 1]} : vector<2x96xf32> to vector<2x32xf32>
    %152 = vector.extract_strided_slice %142 {offsets = [0, 32], sizes = [2, 32], strides = [1, 1]} : vector<2x96xf32> to vector<2x32xf32>
    %153 = arith.addf %151, %152 : vector<2x32xf32>
    %154 = arith.negf %153 : vector<2x32xf32>
    %155 = math.exp %154 : vector<2x32xf32>
    %cst_36 = arith.constant 1.000000e+00 : f32
    %156 = vector.broadcast %cst_36 : f32 to vector<2x32xf32>
    %157 = arith.addf %156, %155 : vector<2x32xf32>
    %158 = arith.divf %156, %157 : vector<2x32xf32>
    %159 = vector.extract_strided_slice %140 {offsets = [0, 64], sizes = [2, 32], strides = [1, 1]} : vector<2x96xf32> to vector<2x32xf32>
    %160 = vector.extract_strided_slice %142 {offsets = [0, 64], sizes = [2, 32], strides = [1, 1]} : vector<2x96xf32> to vector<2x32xf32>
    %161 = vector.broadcast %11 : vector<1x32xf32> to vector<2x32xf32>
    %162 = arith.addf %160, %161 : vector<2x32xf32>
    %163 = arith.mulf %150, %162 : vector<2x32xf32>
    %164 = arith.addf %159, %163 : vector<2x32xf32>
    %165 = math.tanh %164 : vector<2x32xf32>
    %cst_37 = arith.constant 1.000000e+00 : f32
    %166 = vector.broadcast %cst_37 : f32 to vector<2x32xf32>
    %167 = arith.subf %166, %158 : vector<2x32xf32>
    %168 = arith.mulf %167, %165 : vector<2x32xf32>
    %169 = arith.mulf %158, %108 : vector<2x32xf32>
    %170 = arith.addf %168, %169 : vector<2x32xf32>
    %cst_38 = arith.constant 0.000000e+00 : f32
    %171 = vector.shape_cast %16 : vector<2x1xi1> to vector<2x1xi1>
    %172 = vector.broadcast %171 : vector<2x1xi1> to vector<2x32xi1>
    %173 = vector.broadcast %cst_38 : f32 to vector<2x32xf32>
    %174 = arith.select %172, %139, %173 : vector<2x32xi1>, vector<2x32xf32>
    %c2 = arith.constant 2 : index
    %c0_39 = arith.constant 0 : index
    %175 = vector.load %arg11[%c2, %c0_39] : memref<16x32xf32, #tpu.memory_space<vmem>>, vector<2x32xf32>
    tpu.vector_store %arg11[%c2, %c0_39], %174 {strides = array<i32>} : memref<16x32xf32, #tpu.memory_space<vmem>>, vector<2x32xf32>,
    %cst_40 = arith.constant 0.000000e+00 : f32
    %176 = vector.shape_cast %26 : vector<2x1xi1> to vector<2x1xi1>
    %177 = vector.broadcast %176 : vector<2x1xi1> to vector<2x32xi1>
    %178 = vector.broadcast %cst_40 : f32 to vector<2x32xf32>
    %179 = arith.select %177, %170, %178 : vector<2x32xi1>, vector<2x32xf32>
    %c12 = arith.constant 12 : index
    %c0_41 = arith.constant 0 : index
    %180 = vector.load %arg12[%c12, %c0_41] : memref<16x32xf32, #tpu.memory_space<vmem>>, vector<2x32xf32>
    tpu.vector_store %arg12[%c12, %c0_41], %179 {strides = array<i32>} : memref<16x32xf32, #tpu.memory_space<vmem>>, vector<2x32xf32>,
    %181 = vector.shape_cast %16 : vector<2x1xi1> to vector<2x1xi1>
    %182 = vector.broadcast %181 : vector<2x1xi1> to vector<2x32xi1>
    %183 = arith.select %182, %139, %105 : vector<2x32xi1>, vector<2x32xf32>
    %184 = vector.shape_cast %26 : vector<2x1xi1> to vector<2x1xi1>
    %185 = vector.broadcast %184 : vector<2x1xi1> to vector<2x32xi1>
    %186 = arith.select %185, %170, %108 : vector<2x32xi1>, vector<2x32xf32>
    %187 = vector.extract_strided_slice %6 {offsets = [4, 0], sizes = [2, 96], strides = [1, 1]} : vector<16x96xf32> to vector<2x96xf32>
    %188 = arith.truncf %183 : vector<2x32xf32> to vector<2x32xbf16>
    %cst_42 = arith.constant dense<0.000000e+00> : vector<2x96xf32>
    %189 = tpu.matmul %188, %8, %cst_42 {dimension_numbers = #tpu.dot_dimension_numbers<[1], [0], [0], [1], [0, 0, 1, 1], [], []>} : vector<2x32xbf16>, vector<32x96xbf16>, vector<2x96xf32> -> vector<2x96xf32>
    %190 = vector.extract_strided_slice %187 {offsets = [0, 0], sizes = [2, 32], strides = [1, 1]} : vector<2x96xf32> to vector<2x32xf32>
    %191 = vector.extract_strided_slice %189 {offsets = [0, 0], sizes = [2, 32], strides = [1, 1]} : vector<2x96xf32> to vector<2x32xf32>
    %192 = arith.addf %190, %191 : vector<2x32xf32>
    %193 = arith.negf %192 : vector<2x32xf32>
    %194 = math.exp %193 : vector<2x32xf32>
    %cst_43 = arith.constant 1.000000e+00 : f32
    %195 = vector.broadcast %cst_43 : f32 to vector<2x32xf32>
    %196 = arith.addf %195, %194 : vector<2x32xf32>
    %197 = arith.divf %195, %196 : vector<2x32xf32>
    %198 = vector.extract_strided_slice %187 {offsets = [0, 32], sizes = [2, 32], strides = [1, 1]} : vector<2x96xf32> to vector<2x32xf32>
    %199 = vector.extract_strided_slice %189 {offsets = [0, 32], sizes = [2, 32], strides = [1, 1]} : vector<2x96xf32> to vector<2x32xf32>
    %200 = arith.addf %198, %199 : vector<2x32xf32>
    %201 = arith.negf %200 : vector<2x32xf32>
    %202 = math.exp %201 : vector<2x32xf32>
    %cst_44 = arith.constant 1.000000e+00 : f32
    %203 = vector.broadcast %cst_44 : f32 to vector<2x32xf32>
    %204 = arith.addf %203, %202 : vector<2x32xf32>
    %205 = arith.divf %203, %204 : vector<2x32xf32>
    %206 = vector.extract_strided_slice %187 {offsets = [0, 64], sizes = [2, 32], strides = [1, 1]} : vector<2x96xf32> to vector<2x32xf32>
    %207 = vector.extract_strided_slice %189 {offsets = [0, 64], sizes = [2, 32], strides = [1, 1]} : vector<2x96xf32> to vector<2x32xf32>
    %208 = vector.broadcast %10 : vector<1x32xf32> to vector<2x32xf32>
    %209 = arith.addf %207, %208 : vector<2x32xf32>
    %210 = arith.mulf %197, %209 : vector<2x32xf32>
    %211 = arith.addf %206, %210 : vector<2x32xf32>
    %212 = math.tanh %211 : vector<2x32xf32>
    %cst_45 = arith.constant 1.000000e+00 : f32
    %213 = vector.broadcast %cst_45 : f32 to vector<2x32xf32>
    %214 = arith.subf %213, %205 : vector<2x32xf32>
    %215 = arith.mulf %214, %212 : vector<2x32xf32>
    %216 = arith.mulf %205, %183 : vector<2x32xf32>
    %217 = arith.addf %215, %216 : vector<2x32xf32>
    %218 = vector.extract_strided_slice %7 {offsets = [10, 0], sizes = [2, 96], strides = [1, 1]} : vector<16x96xf32> to vector<2x96xf32>
    %219 = arith.truncf %186 : vector<2x32xf32> to vector<2x32xbf16>
    %cst_46 = arith.constant dense<0.000000e+00> : vector<2x96xf32>
    %220 = tpu.matmul %219, %9, %cst_46 {dimension_numbers = #tpu.dot_dimension_numbers<[1], [0], [0], [1], [0, 0, 1, 1], [], []>} : vector<2x32xbf16>, vector<32x96xbf16>, vector<2x96xf32> -> vector<2x96xf32>
    %221 = vector.extract_strided_slice %218 {offsets = [0, 0], sizes = [2, 32], strides = [1, 1]} : vector<2x96xf32> to vector<2x32xf32>
    %222 = vector.extract_strided_slice %220 {offsets = [0, 0], sizes = [2, 32], strides = [1, 1]} : vector<2x96xf32> to vector<2x32xf32>
    %223 = arith.addf %221, %222 : vector<2x32xf32>
    %224 = arith.negf %223 : vector<2x32xf32>
    %225 = math.exp %224 : vector<2x32xf32>
    %cst_47 = arith.constant 1.000000e+00 : f32
    %226 = vector.broadcast %cst_47 : f32 to vector<2x32xf32>
    %227 = arith.addf %226, %225 : vector<2x32xf32>
    %228 = arith.divf %226, %227 : vector<2x32xf32>
    %229 = vector.extract_strided_slice %218 {offsets = [0, 32], sizes = [2, 32], strides = [1, 1]} : vector<2x96xf32> to vector<2x32xf32>
    %230 = vector.extract_strided_slice %220 {offsets = [0, 32], sizes = [2, 32], strides = [1, 1]} : vector<2x96xf32> to vector<2x32xf32>
    %231 = arith.addf %229, %230 : vector<2x32xf32>
    %232 = arith.negf %231 : vector<2x32xf32>
    %233 = math.exp %232 : vector<2x32xf32>
    %cst_48 = arith.constant 1.000000e+00 : f32
    %234 = vector.broadcast %cst_48 : f32 to vector<2x32xf32>
    %235 = arith.addf %234, %233 : vector<2x32xf32>
    %236 = arith.divf %234, %235 : vector<2x32xf32>
    %237 = vector.extract_strided_slice %218 {offsets = [0, 64], sizes = [2, 32], strides = [1, 1]} : vector<2x96xf32> to vector<2x32xf32>
    %238 = vector.extract_strided_slice %220 {offsets = [0, 64], sizes = [2, 32], strides = [1, 1]} : vector<2x96xf32> to vector<2x32xf32>
    %239 = vector.broadcast %11 : vector<1x32xf32> to vector<2x32xf32>
    %240 = arith.addf %238, %239 : vector<2x32xf32>
    %241 = arith.mulf %228, %240 : vector<2x32xf32>
    %242 = arith.addf %237, %241 : vector<2x32xf32>
    %243 = math.tanh %242 : vector<2x32xf32>
    %cst_49 = arith.constant 1.000000e+00 : f32
    %244 = vector.broadcast %cst_49 : f32 to vector<2x32xf32>
    %245 = arith.subf %244, %236 : vector<2x32xf32>
    %246 = arith.mulf %245, %243 : vector<2x32xf32>
    %247 = arith.mulf %236, %186 : vector<2x32xf32>
    %248 = arith.addf %246, %247 : vector<2x32xf32>
    %cst_50 = arith.constant 0.000000e+00 : f32
    %249 = vector.shape_cast %18 : vector<2x1xi1> to vector<2x1xi1>
    %250 = vector.broadcast %249 : vector<2x1xi1> to vector<2x32xi1>
    %251 = vector.broadcast %cst_50 : f32 to vector<2x32xf32>
    %252 = arith.select %250, %217, %251 : vector<2x32xi1>, vector<2x32xf32>
    %c4 = arith.constant 4 : index
    %c0_51 = arith.constant 0 : index
    %253 = vector.load %arg11[%c4, %c0_51] : memref<16x32xf32, #tpu.memory_space<vmem>>, vector<2x32xf32>
    tpu.vector_store %arg11[%c4, %c0_51], %252 {strides = array<i32>} : memref<16x32xf32, #tpu.memory_space<vmem>>, vector<2x32xf32>,
    %cst_52 = arith.constant 0.000000e+00 : f32
    %254 = vector.shape_cast %24 : vector<2x1xi1> to vector<2x1xi1>
    %255 = vector.broadcast %254 : vector<2x1xi1> to vector<2x32xi1>
    %256 = vector.broadcast %cst_52 : f32 to vector<2x32xf32>
    %257 = arith.select %255, %248, %256 : vector<2x32xi1>, vector<2x32xf32>
    %c10 = arith.constant 10 : index
    %c0_53 = arith.constant 0 : index
    %258 = vector.load %arg12[%c10, %c0_53] : memref<16x32xf32, #tpu.memory_space<vmem>>, vector<2x32xf32>
    tpu.vector_store %arg12[%c10, %c0_53], %257 {strides = array<i32>} : memref<16x32xf32, #tpu.memory_space<vmem>>, vector<2x32xf32>,
    %259 = vector.shape_cast %18 : vector<2x1xi1> to vector<2x1xi1>
    %260 = vector.broadcast %259 : vector<2x1xi1> to vector<2x32xi1>
    %261 = arith.select %260, %217, %183 : vector<2x32xi1>, vector<2x32xf32>
    %262 = vector.shape_cast %24 : vector<2x1xi1> to vector<2x1xi1>
    %263 = vector.broadcast %262 : vector<2x1xi1> to vector<2x32xi1>
    %264 = arith.select %263, %248, %186 : vector<2x32xi1>, vector<2x32xf32>
    %265 = vector.extract_strided_slice %6 {offsets = [6, 0], sizes = [2, 96], strides = [1, 1]} : vector<16x96xf32> to vector<2x96xf32>
    %266 = arith.truncf %261 : vector<2x32xf32> to vector<2x32xbf16>
    %cst_54 = arith.constant dense<0.000000e+00> : vector<2x96xf32>
    %267 = tpu.matmul %266, %8, %cst_54 {dimension_numbers = #tpu.dot_dimension_numbers<[1], [0], [0], [1], [0, 0, 1, 1], [], []>} : vector<2x32xbf16>, vector<32x96xbf16>, vector<2x96xf32> -> vector<2x96xf32>
    %268 = vector.extract_strided_slice %265 {offsets = [0, 0], sizes = [2, 32], strides = [1, 1]} : vector<2x96xf32> to vector<2x32xf32>
    %269 = vector.extract_strided_slice %267 {offsets = [0, 0], sizes = [2, 32], strides = [1, 1]} : vector<2x96xf32> to vector<2x32xf32>
    %270 = arith.addf %268, %269 : vector<2x32xf32>
    %271 = arith.negf %270 : vector<2x32xf32>
    %272 = math.exp %271 : vector<2x32xf32>
    %cst_55 = arith.constant 1.000000e+00 : f32
    %273 = vector.broadcast %cst_55 : f32 to vector<2x32xf32>
    %274 = arith.addf %273, %272 : vector<2x32xf32>
    %275 = arith.divf %273, %274 : vector<2x32xf32>
    %276 = vector.extract_strided_slice %265 {offsets = [0, 32], sizes = [2, 32], strides = [1, 1]} : vector<2x96xf32> to vector<2x32xf32>
    %277 = vector.extract_strided_slice %267 {offsets = [0, 32], sizes = [2, 32], strides = [1, 1]} : vector<2x96xf32> to vector<2x32xf32>
    %278 = arith.addf %276, %277 : vector<2x32xf32>
    %279 = arith.negf %278 : vector<2x32xf32>
    %280 = math.exp %279 : vector<2x32xf32>
    %cst_56 = arith.constant 1.000000e+00 : f32
    %281 = vector.broadcast %cst_56 : f32 to vector<2x32xf32>
    %282 = arith.addf %281, %280 : vector<2x32xf32>
    %283 = arith.divf %281, %282 : vector<2x32xf32>
    %284 = vector.extract_strided_slice %265 {offsets = [0, 64], sizes = [2, 32], strides = [1, 1]} : vector<2x96xf32> to vector<2x32xf32>
    %285 = vector.extract_strided_slice %267 {offsets = [0, 64], sizes = [2, 32], strides = [1, 1]} : vector<2x96xf32> to vector<2x32xf32>
    %286 = vector.broadcast %10 : vector<1x32xf32> to vector<2x32xf32>
    %287 = arith.addf %285, %286 : vector<2x32xf32>
    %288 = arith.mulf %275, %287 : vector<2x32xf32>
    %289 = arith.addf %284, %288 : vector<2x32xf32>
    %290 = math.tanh %289 : vector<2x32xf32>
    %cst_57 = arith.constant 1.000000e+00 : f32
    %291 = vector.broadcast %cst_57 : f32 to vector<2x32xf32>
    %292 = arith.subf %291, %283 : vector<2x32xf32>
    %293 = arith.mulf %292, %290 : vector<2x32xf32>
    %294 = arith.mulf %283, %261 : vector<2x32xf32>
    %295 = arith.addf %293, %294 : vector<2x32xf32>
    %296 = vector.extract_strided_slice %7 {offsets = [8, 0], sizes = [2, 96], strides = [1, 1]} : vector<16x96xf32> to vector<2x96xf32>
    %297 = arith.truncf %264 : vector<2x32xf32> to vector<2x32xbf16>
    %cst_58 = arith.constant dense<0.000000e+00> : vector<2x96xf32>
    %298 = tpu.matmul %297, %9, %cst_58 {dimension_numbers = #tpu.dot_dimension_numbers<[1], [0], [0], [1], [0, 0, 1, 1], [], []>} : vector<2x32xbf16>, vector<32x96xbf16>, vector<2x96xf32> -> vector<2x96xf32>
    %299 = vector.extract_strided_slice %296 {offsets = [0, 0], sizes = [2, 32], strides = [1, 1]} : vector<2x96xf32> to vector<2x32xf32>
    %300 = vector.extract_strided_slice %298 {offsets = [0, 0], sizes = [2, 32], strides = [1, 1]} : vector<2x96xf32> to vector<2x32xf32>
    %301 = arith.addf %299, %300 : vector<2x32xf32>
    %302 = arith.negf %301 : vector<2x32xf32>
    %303 = math.exp %302 : vector<2x32xf32>
    %cst_59 = arith.constant 1.000000e+00 : f32
    %304 = vector.broadcast %cst_59 : f32 to vector<2x32xf32>
    %305 = arith.addf %304, %303 : vector<2x32xf32>
    %306 = arith.divf %304, %305 : vector<2x32xf32>
    %307 = vector.extract_strided_slice %296 {offsets = [0, 32], sizes = [2, 32], strides = [1, 1]} : vector<2x96xf32> to vector<2x32xf32>
    %308 = vector.extract_strided_slice %298 {offsets = [0, 32], sizes = [2, 32], strides = [1, 1]} : vector<2x96xf32> to vector<2x32xf32>
    %309 = arith.addf %307, %308 : vector<2x32xf32>
    %310 = arith.negf %309 : vector<2x32xf32>
    %311 = math.exp %310 : vector<2x32xf32>
    %cst_60 = arith.constant 1.000000e+00 : f32
    %312 = vector.broadcast %cst_60 : f32 to vector<2x32xf32>
    %313 = arith.addf %312, %311 : vector<2x32xf32>
    %314 = arith.divf %312, %313 : vector<2x32xf32>
    %315 = vector.extract_strided_slice %296 {offsets = [0, 64], sizes = [2, 32], strides = [1, 1]} : vector<2x96xf32> to vector<2x32xf32>
    %316 = vector.extract_strided_slice %298 {offsets = [0, 64], sizes = [2, 32], strides = [1, 1]} : vector<2x96xf32> to vector<2x32xf32>
    %317 = vector.broadcast %11 : vector<1x32xf32> to vector<2x32xf32>
    %318 = arith.addf %316, %317 : vector<2x32xf32>
    %319 = arith.mulf %306, %318 : vector<2x32xf32>
    %320 = arith.addf %315, %319 : vector<2x32xf32>
    %321 = math.tanh %320 : vector<2x32xf32>
    %cst_61 = arith.constant 1.000000e+00 : f32
    %322 = vector.broadcast %cst_61 : f32 to vector<2x32xf32>
    %323 = arith.subf %322, %314 : vector<2x32xf32>
    %324 = arith.mulf %323, %321 : vector<2x32xf32>
    %325 = arith.mulf %314, %264 : vector<2x32xf32>
    %326 = arith.addf %324, %325 : vector<2x32xf32>
    %cst_62 = arith.constant 0.000000e+00 : f32
    %327 = vector.shape_cast %20 : vector<2x1xi1> to vector<2x1xi1>
    %328 = vector.broadcast %327 : vector<2x1xi1> to vector<2x32xi1>
    %329 = vector.broadcast %cst_62 : f32 to vector<2x32xf32>
    %330 = arith.select %328, %295, %329 : vector<2x32xi1>, vector<2x32xf32>
    %c6 = arith.constant 6 : index
    %c0_63 = arith.constant 0 : index
    %331 = vector.load %arg11[%c6, %c0_63] : memref<16x32xf32, #tpu.memory_space<vmem>>, vector<2x32xf32>
    tpu.vector_store %arg11[%c6, %c0_63], %330 {strides = array<i32>} : memref<16x32xf32, #tpu.memory_space<vmem>>, vector<2x32xf32>,
    %cst_64 = arith.constant 0.000000e+00 : f32
    %332 = vector.shape_cast %22 : vector<2x1xi1> to vector<2x1xi1>
    %333 = vector.broadcast %332 : vector<2x1xi1> to vector<2x32xi1>
    %334 = vector.broadcast %cst_64 : f32 to vector<2x32xf32>
    %335 = arith.select %333, %326, %334 : vector<2x32xi1>, vector<2x32xf32>
    %c8 = arith.constant 8 : index
    %c0_65 = arith.constant 0 : index
    %336 = vector.load %arg12[%c8, %c0_65] : memref<16x32xf32, #tpu.memory_space<vmem>>, vector<2x32xf32>
    tpu.vector_store %arg12[%c8, %c0_65], %335 {strides = array<i32>} : memref<16x32xf32, #tpu.memory_space<vmem>>, vector<2x32xf32>,
    %337 = vector.shape_cast %20 : vector<2x1xi1> to vector<2x1xi1>
    %338 = vector.broadcast %337 : vector<2x1xi1> to vector<2x32xi1>
    %339 = arith.select %338, %295, %261 : vector<2x32xi1>, vector<2x32xf32>
    %340 = vector.shape_cast %22 : vector<2x1xi1> to vector<2x1xi1>
    %341 = vector.broadcast %340 : vector<2x1xi1> to vector<2x32xi1>
    %342 = arith.select %341, %326, %264 : vector<2x32xi1>, vector<2x32xf32>
    %343 = vector.extract_strided_slice %6 {offsets = [8, 0], sizes = [2, 96], strides = [1, 1]} : vector<16x96xf32> to vector<2x96xf32>
    %344 = arith.truncf %339 : vector<2x32xf32> to vector<2x32xbf16>
    %cst_66 = arith.constant dense<0.000000e+00> : vector<2x96xf32>
    %345 = tpu.matmul %344, %8, %cst_66 {dimension_numbers = #tpu.dot_dimension_numbers<[1], [0], [0], [1], [0, 0, 1, 1], [], []>} : vector<2x32xbf16>, vector<32x96xbf16>, vector<2x96xf32> -> vector<2x96xf32>
    %346 = vector.extract_strided_slice %343 {offsets = [0, 0], sizes = [2, 32], strides = [1, 1]} : vector<2x96xf32> to vector<2x32xf32>
    %347 = vector.extract_strided_slice %345 {offsets = [0, 0], sizes = [2, 32], strides = [1, 1]} : vector<2x96xf32> to vector<2x32xf32>
    %348 = arith.addf %346, %347 : vector<2x32xf32>
    %349 = arith.negf %348 : vector<2x32xf32>
    %350 = math.exp %349 : vector<2x32xf32>
    %cst_67 = arith.constant 1.000000e+00 : f32
    %351 = vector.broadcast %cst_67 : f32 to vector<2x32xf32>
    %352 = arith.addf %351, %350 : vector<2x32xf32>
    %353 = arith.divf %351, %352 : vector<2x32xf32>
    %354 = vector.extract_strided_slice %343 {offsets = [0, 32], sizes = [2, 32], strides = [1, 1]} : vector<2x96xf32> to vector<2x32xf32>
    %355 = vector.extract_strided_slice %345 {offsets = [0, 32], sizes = [2, 32], strides = [1, 1]} : vector<2x96xf32> to vector<2x32xf32>
    %356 = arith.addf %354, %355 : vector<2x32xf32>
    %357 = arith.negf %356 : vector<2x32xf32>
    %358 = math.exp %357 : vector<2x32xf32>
    %cst_68 = arith.constant 1.000000e+00 : f32
    %359 = vector.broadcast %cst_68 : f32 to vector<2x32xf32>
    %360 = arith.addf %359, %358 : vector<2x32xf32>
    %361 = arith.divf %359, %360 : vector<2x32xf32>
    %362 = vector.extract_strided_slice %343 {offsets = [0, 64], sizes = [2, 32], strides = [1, 1]} : vector<2x96xf32> to vector<2x32xf32>
    %363 = vector.extract_strided_slice %345 {offsets = [0, 64], sizes = [2, 32], strides = [1, 1]} : vector<2x96xf32> to vector<2x32xf32>
    %364 = vector.broadcast %10 : vector<1x32xf32> to vector<2x32xf32>
    %365 = arith.addf %363, %364 : vector<2x32xf32>
    %366 = arith.mulf %353, %365 : vector<2x32xf32>
    %367 = arith.addf %362, %366 : vector<2x32xf32>
    %368 = math.tanh %367 : vector<2x32xf32>
    %cst_69 = arith.constant 1.000000e+00 : f32
    %369 = vector.broadcast %cst_69 : f32 to vector<2x32xf32>
    %370 = arith.subf %369, %361 : vector<2x32xf32>
    %371 = arith.mulf %370, %368 : vector<2x32xf32>
    %372 = arith.mulf %361, %339 : vector<2x32xf32>
    %373 = arith.addf %371, %372 : vector<2x32xf32>
    %374 = vector.extract_strided_slice %7 {offsets = [6, 0], sizes = [2, 96], strides = [1, 1]} : vector<16x96xf32> to vector<2x96xf32>
    %375 = arith.truncf %342 : vector<2x32xf32> to vector<2x32xbf16>
    %cst_70 = arith.constant dense<0.000000e+00> : vector<2x96xf32>
    %376 = tpu.matmul %375, %9, %cst_70 {dimension_numbers = #tpu.dot_dimension_numbers<[1], [0], [0], [1], [0, 0, 1, 1], [], []>} : vector<2x32xbf16>, vector<32x96xbf16>, vector<2x96xf32> -> vector<2x96xf32>
    %377 = vector.extract_strided_slice %374 {offsets = [0, 0], sizes = [2, 32], strides = [1, 1]} : vector<2x96xf32> to vector<2x32xf32>
    %378 = vector.extract_strided_slice %376 {offsets = [0, 0], sizes = [2, 32], strides = [1, 1]} : vector<2x96xf32> to vector<2x32xf32>
    %379 = arith.addf %377, %378 : vector<2x32xf32>
    %380 = arith.negf %379 : vector<2x32xf32>
    %381 = math.exp %380 : vector<2x32xf32>
    %cst_71 = arith.constant 1.000000e+00 : f32
    %382 = vector.broadcast %cst_71 : f32 to vector<2x32xf32>
    %383 = arith.addf %382, %381 : vector<2x32xf32>
    %384 = arith.divf %382, %383 : vector<2x32xf32>
    %385 = vector.extract_strided_slice %374 {offsets = [0, 32], sizes = [2, 32], strides = [1, 1]} : vector<2x96xf32> to vector<2x32xf32>
    %386 = vector.extract_strided_slice %376 {offsets = [0, 32], sizes = [2, 32], strides = [1, 1]} : vector<2x96xf32> to vector<2x32xf32>
    %387 = arith.addf %385, %386 : vector<2x32xf32>
    %388 = arith.negf %387 : vector<2x32xf32>
    %389 = math.exp %388 : vector<2x32xf32>
    %cst_72 = arith.constant 1.000000e+00 : f32
    %390 = vector.broadcast %cst_72 : f32 to vector<2x32xf32>
    %391 = arith.addf %390, %389 : vector<2x32xf32>
    %392 = arith.divf %390, %391 : vector<2x32xf32>
    %393 = vector.extract_strided_slice %374 {offsets = [0, 64], sizes = [2, 32], strides = [1, 1]} : vector<2x96xf32> to vector<2x32xf32>
    %394 = vector.extract_strided_slice %376 {offsets = [0, 64], sizes = [2, 32], strides = [1, 1]} : vector<2x96xf32> to vector<2x32xf32>
    %395 = vector.broadcast %11 : vector<1x32xf32> to vector<2x32xf32>
    %396 = arith.addf %394, %395 : vector<2x32xf32>
    %397 = arith.mulf %384, %396 : vector<2x32xf32>
    %398 = arith.addf %393, %397 : vector<2x32xf32>
    %399 = math.tanh %398 : vector<2x32xf32>
    %cst_73 = arith.constant 1.000000e+00 : f32
    %400 = vector.broadcast %cst_73 : f32 to vector<2x32xf32>
    %401 = arith.subf %400, %392 : vector<2x32xf32>
    %402 = arith.mulf %401, %399 : vector<2x32xf32>
    %403 = arith.mulf %392, %342 : vector<2x32xf32>
    %404 = arith.addf %402, %403 : vector<2x32xf32>
    %cst_74 = arith.constant 0.000000e+00 : f32
    %405 = vector.shape_cast %22 : vector<2x1xi1> to vector<2x1xi1>
    %406 = vector.broadcast %405 : vector<2x1xi1> to vector<2x32xi1>
    %407 = vector.broadcast %cst_74 : f32 to vector<2x32xf32>
    %408 = arith.select %406, %373, %407 : vector<2x32xi1>, vector<2x32xf32>
    %c8_75 = arith.constant 8 : index
    %c0_76 = arith.constant 0 : index
    %409 = vector.load %arg11[%c8_75, %c0_76] : memref<16x32xf32, #tpu.memory_space<vmem>>, vector<2x32xf32>
    tpu.vector_store %arg11[%c8_75, %c0_76], %408 {strides = array<i32>} : memref<16x32xf32, #tpu.memory_space<vmem>>, vector<2x32xf32>,
    %cst_77 = arith.constant 0.000000e+00 : f32
    %410 = vector.shape_cast %20 : vector<2x1xi1> to vector<2x1xi1>
    %411 = vector.broadcast %410 : vector<2x1xi1> to vector<2x32xi1>
    %412 = vector.broadcast %cst_77 : f32 to vector<2x32xf32>
    %413 = arith.select %411, %404, %412 : vector<2x32xi1>, vector<2x32xf32>
    %c6_78 = arith.constant 6 : index
    %c0_79 = arith.constant 0 : index
    %414 = vector.load %arg12[%c6_78, %c0_79] : memref<16x32xf32, #tpu.memory_space<vmem>>, vector<2x32xf32>
    tpu.vector_store %arg12[%c6_78, %c0_79], %413 {strides = array<i32>} : memref<16x32xf32, #tpu.memory_space<vmem>>, vector<2x32xf32>,
    %415 = vector.shape_cast %22 : vector<2x1xi1> to vector<2x1xi1>
    %416 = vector.broadcast %415 : vector<2x1xi1> to vector<2x32xi1>
    %417 = arith.select %416, %373, %339 : vector<2x32xi1>, vector<2x32xf32>
    %418 = vector.shape_cast %20 : vector<2x1xi1> to vector<2x1xi1>
    %419 = vector.broadcast %418 : vector<2x1xi1> to vector<2x32xi1>
    %420 = arith.select %419, %404, %342 : vector<2x32xi1>, vector<2x32xf32>
    %421 = vector.extract_strided_slice %6 {offsets = [10, 0], sizes = [2, 96], strides = [1, 1]} : vector<16x96xf32> to vector<2x96xf32>
    %422 = arith.truncf %417 : vector<2x32xf32> to vector<2x32xbf16>
    %cst_80 = arith.constant dense<0.000000e+00> : vector<2x96xf32>
    %423 = tpu.matmul %422, %8, %cst_80 {dimension_numbers = #tpu.dot_dimension_numbers<[1], [0], [0], [1], [0, 0, 1, 1], [], []>} : vector<2x32xbf16>, vector<32x96xbf16>, vector<2x96xf32> -> vector<2x96xf32>
    %424 = vector.extract_strided_slice %421 {offsets = [0, 0], sizes = [2, 32], strides = [1, 1]} : vector<2x96xf32> to vector<2x32xf32>
    %425 = vector.extract_strided_slice %423 {offsets = [0, 0], sizes = [2, 32], strides = [1, 1]} : vector<2x96xf32> to vector<2x32xf32>
    %426 = arith.addf %424, %425 : vector<2x32xf32>
    %427 = arith.negf %426 : vector<2x32xf32>
    %428 = math.exp %427 : vector<2x32xf32>
    %cst_81 = arith.constant 1.000000e+00 : f32
    %429 = vector.broadcast %cst_81 : f32 to vector<2x32xf32>
    %430 = arith.addf %429, %428 : vector<2x32xf32>
    %431 = arith.divf %429, %430 : vector<2x32xf32>
    %432 = vector.extract_strided_slice %421 {offsets = [0, 32], sizes = [2, 32], strides = [1, 1]} : vector<2x96xf32> to vector<2x32xf32>
    %433 = vector.extract_strided_slice %423 {offsets = [0, 32], sizes = [2, 32], strides = [1, 1]} : vector<2x96xf32> to vector<2x32xf32>
    %434 = arith.addf %432, %433 : vector<2x32xf32>
    %435 = arith.negf %434 : vector<2x32xf32>
    %436 = math.exp %435 : vector<2x32xf32>
    %cst_82 = arith.constant 1.000000e+00 : f32
    %437 = vector.broadcast %cst_82 : f32 to vector<2x32xf32>
    %438 = arith.addf %437, %436 : vector<2x32xf32>
    %439 = arith.divf %437, %438 : vector<2x32xf32>
    %440 = vector.extract_strided_slice %421 {offsets = [0, 64], sizes = [2, 32], strides = [1, 1]} : vector<2x96xf32> to vector<2x32xf32>
    %441 = vector.extract_strided_slice %423 {offsets = [0, 64], sizes = [2, 32], strides = [1, 1]} : vector<2x96xf32> to vector<2x32xf32>
    %442 = vector.broadcast %10 : vector<1x32xf32> to vector<2x32xf32>
    %443 = arith.addf %441, %442 : vector<2x32xf32>
    %444 = arith.mulf %431, %443 : vector<2x32xf32>
    %445 = arith.addf %440, %444 : vector<2x32xf32>
    %446 = math.tanh %445 : vector<2x32xf32>
    %cst_83 = arith.constant 1.000000e+00 : f32
    %447 = vector.broadcast %cst_83 : f32 to vector<2x32xf32>
    %448 = arith.subf %447, %439 : vector<2x32xf32>
    %449 = arith.mulf %448, %446 : vector<2x32xf32>
    %450 = arith.mulf %439, %417 : vector<2x32xf32>
    %451 = arith.addf %449, %450 : vector<2x32xf32>
    %452 = vector.extract_strided_slice %7 {offsets = [4, 0], sizes = [2, 96], strides = [1, 1]} : vector<16x96xf32> to vector<2x96xf32>
    %453 = arith.truncf %420 : vector<2x32xf32> to vector<2x32xbf16>
    %cst_84 = arith.constant dense<0.000000e+00> : vector<2x96xf32>
    %454 = tpu.matmul %453, %9, %cst_84 {dimension_numbers = #tpu.dot_dimension_numbers<[1], [0], [0], [1], [0, 0, 1, 1], [], []>} : vector<2x32xbf16>, vector<32x96xbf16>, vector<2x96xf32> -> vector<2x96xf32>
    %455 = vector.extract_strided_slice %452 {offsets = [0, 0], sizes = [2, 32], strides = [1, 1]} : vector<2x96xf32> to vector<2x32xf32>
    %456 = vector.extract_strided_slice %454 {offsets = [0, 0], sizes = [2, 32], strides = [1, 1]} : vector<2x96xf32> to vector<2x32xf32>
    %457 = arith.addf %455, %456 : vector<2x32xf32>
    %458 = arith.negf %457 : vector<2x32xf32>
    %459 = math.exp %458 : vector<2x32xf32>
    %cst_85 = arith.constant 1.000000e+00 : f32
    %460 = vector.broadcast %cst_85 : f32 to vector<2x32xf32>
    %461 = arith.addf %460, %459 : vector<2x32xf32>
    %462 = arith.divf %460, %461 : vector<2x32xf32>
    %463 = vector.extract_strided_slice %452 {offsets = [0, 32], sizes = [2, 32], strides = [1, 1]} : vector<2x96xf32> to vector<2x32xf32>
    %464 = vector.extract_strided_slice %454 {offsets = [0, 32], sizes = [2, 32], strides = [1, 1]} : vector<2x96xf32> to vector<2x32xf32>
    %465 = arith.addf %463, %464 : vector<2x32xf32>
    %466 = arith.negf %465 : vector<2x32xf32>
    %467 = math.exp %466 : vector<2x32xf32>
    %cst_86 = arith.constant 1.000000e+00 : f32
    %468 = vector.broadcast %cst_86 : f32 to vector<2x32xf32>
    %469 = arith.addf %468, %467 : vector<2x32xf32>
    %470 = arith.divf %468, %469 : vector<2x32xf32>
    %471 = vector.extract_strided_slice %452 {offsets = [0, 64], sizes = [2, 32], strides = [1, 1]} : vector<2x96xf32> to vector<2x32xf32>
    %472 = vector.extract_strided_slice %454 {offsets = [0, 64], sizes = [2, 32], strides = [1, 1]} : vector<2x96xf32> to vector<2x32xf32>
    %473 = vector.broadcast %11 : vector<1x32xf32> to vector<2x32xf32>
    %474 = arith.addf %472, %473 : vector<2x32xf32>
    %475 = arith.mulf %462, %474 : vector<2x32xf32>
    %476 = arith.addf %471, %475 : vector<2x32xf32>
    %477 = math.tanh %476 : vector<2x32xf32>
    %cst_87 = arith.constant 1.000000e+00 : f32
    %478 = vector.broadcast %cst_87 : f32 to vector<2x32xf32>
    %479 = arith.subf %478, %470 : vector<2x32xf32>
    %480 = arith.mulf %479, %477 : vector<2x32xf32>
    %481 = arith.mulf %470, %420 : vector<2x32xf32>
    %482 = arith.addf %480, %481 : vector<2x32xf32>
    %cst_88 = arith.constant 0.000000e+00 : f32
    %483 = vector.shape_cast %24 : vector<2x1xi1> to vector<2x1xi1>
    %484 = vector.broadcast %483 : vector<2x1xi1> to vector<2x32xi1>
    %485 = vector.broadcast %cst_88 : f32 to vector<2x32xf32>
    %486 = arith.select %484, %451, %485 : vector<2x32xi1>, vector<2x32xf32>
    %c10_89 = arith.constant 10 : index
    %c0_90 = arith.constant 0 : index
    %487 = vector.load %arg11[%c10_89, %c0_90] : memref<16x32xf32, #tpu.memory_space<vmem>>, vector<2x32xf32>
    tpu.vector_store %arg11[%c10_89, %c0_90], %486 {strides = array<i32>} : memref<16x32xf32, #tpu.memory_space<vmem>>, vector<2x32xf32>,
    %cst_91 = arith.constant 0.000000e+00 : f32
    %488 = vector.shape_cast %18 : vector<2x1xi1> to vector<2x1xi1>
    %489 = vector.broadcast %488 : vector<2x1xi1> to vector<2x32xi1>
    %490 = vector.broadcast %cst_91 : f32 to vector<2x32xf32>
    %491 = arith.select %489, %482, %490 : vector<2x32xi1>, vector<2x32xf32>
    %c4_92 = arith.constant 4 : index
    %c0_93 = arith.constant 0 : index
    %492 = vector.load %arg12[%c4_92, %c0_93] : memref<16x32xf32, #tpu.memory_space<vmem>>, vector<2x32xf32>
    tpu.vector_store %arg12[%c4_92, %c0_93], %491 {strides = array<i32>} : memref<16x32xf32, #tpu.memory_space<vmem>>, vector<2x32xf32>,
    %493 = vector.shape_cast %24 : vector<2x1xi1> to vector<2x1xi1>
    %494 = vector.broadcast %493 : vector<2x1xi1> to vector<2x32xi1>
    %495 = arith.select %494, %451, %417 : vector<2x32xi1>, vector<2x32xf32>
    %496 = vector.shape_cast %18 : vector<2x1xi1> to vector<2x1xi1>
    %497 = vector.broadcast %496 : vector<2x1xi1> to vector<2x32xi1>
    %498 = arith.select %497, %482, %420 : vector<2x32xi1>, vector<2x32xf32>
    %499 = vector.extract_strided_slice %6 {offsets = [12, 0], sizes = [2, 96], strides = [1, 1]} : vector<16x96xf32> to vector<2x96xf32>
    %500 = arith.truncf %495 : vector<2x32xf32> to vector<2x32xbf16>
    %cst_94 = arith.constant dense<0.000000e+00> : vector<2x96xf32>
    %501 = tpu.matmul %500, %8, %cst_94 {dimension_numbers = #tpu.dot_dimension_numbers<[1], [0], [0], [1], [0, 0, 1, 1], [], []>} : vector<2x32xbf16>, vector<32x96xbf16>, vector<2x96xf32> -> vector<2x96xf32>
    %502 = vector.extract_strided_slice %499 {offsets = [0, 0], sizes = [2, 32], strides = [1, 1]} : vector<2x96xf32> to vector<2x32xf32>
    %503 = vector.extract_strided_slice %501 {offsets = [0, 0], sizes = [2, 32], strides = [1, 1]} : vector<2x96xf32> to vector<2x32xf32>
    %504 = arith.addf %502, %503 : vector<2x32xf32>
    %505 = arith.negf %504 : vector<2x32xf32>
    %506 = math.exp %505 : vector<2x32xf32>
    %cst_95 = arith.constant 1.000000e+00 : f32
    %507 = vector.broadcast %cst_95 : f32 to vector<2x32xf32>
    %508 = arith.addf %507, %506 : vector<2x32xf32>
    %509 = arith.divf %507, %508 : vector<2x32xf32>
    %510 = vector.extract_strided_slice %499 {offsets = [0, 32], sizes = [2, 32], strides = [1, 1]} : vector<2x96xf32> to vector<2x32xf32>
    %511 = vector.extract_strided_slice %501 {offsets = [0, 32], sizes = [2, 32], strides = [1, 1]} : vector<2x96xf32> to vector<2x32xf32>
    %512 = arith.addf %510, %511 : vector<2x32xf32>
    %513 = arith.negf %512 : vector<2x32xf32>
    %514 = math.exp %513 : vector<2x32xf32>
    %cst_96 = arith.constant 1.000000e+00 : f32
    %515 = vector.broadcast %cst_96 : f32 to vector<2x32xf32>
    %516 = arith.addf %515, %514 : vector<2x32xf32>
    %517 = arith.divf %515, %516 : vector<2x32xf32>
    %518 = vector.extract_strided_slice %499 {offsets = [0, 64], sizes = [2, 32], strides = [1, 1]} : vector<2x96xf32> to vector<2x32xf32>
    %519 = vector.extract_strided_slice %501 {offsets = [0, 64], sizes = [2, 32], strides = [1, 1]} : vector<2x96xf32> to vector<2x32xf32>
    %520 = vector.broadcast %10 : vector<1x32xf32> to vector<2x32xf32>
    %521 = arith.addf %519, %520 : vector<2x32xf32>
    %522 = arith.mulf %509, %521 : vector<2x32xf32>
    %523 = arith.addf %518, %522 : vector<2x32xf32>
    %524 = math.tanh %523 : vector<2x32xf32>
    %cst_97 = arith.constant 1.000000e+00 : f32
    %525 = vector.broadcast %cst_97 : f32 to vector<2x32xf32>
    %526 = arith.subf %525, %517 : vector<2x32xf32>
    %527 = arith.mulf %526, %524 : vector<2x32xf32>
    %528 = arith.mulf %517, %495 : vector<2x32xf32>
    %529 = arith.addf %527, %528 : vector<2x32xf32>
    %530 = vector.extract_strided_slice %7 {offsets = [2, 0], sizes = [2, 96], strides = [1, 1]} : vector<16x96xf32> to vector<2x96xf32>
    %531 = arith.truncf %498 : vector<2x32xf32> to vector<2x32xbf16>
    %cst_98 = arith.constant dense<0.000000e+00> : vector<2x96xf32>
    %532 = tpu.matmul %531, %9, %cst_98 {dimension_numbers = #tpu.dot_dimension_numbers<[1], [0], [0], [1], [0, 0, 1, 1], [], []>} : vector<2x32xbf16>, vector<32x96xbf16>, vector<2x96xf32> -> vector<2x96xf32>
    %533 = vector.extract_strided_slice %530 {offsets = [0, 0], sizes = [2, 32], strides = [1, 1]} : vector<2x96xf32> to vector<2x32xf32>
    %534 = vector.extract_strided_slice %532 {offsets = [0, 0], sizes = [2, 32], strides = [1, 1]} : vector<2x96xf32> to vector<2x32xf32>
    %535 = arith.addf %533, %534 : vector<2x32xf32>
    %536 = arith.negf %535 : vector<2x32xf32>
    %537 = math.exp %536 : vector<2x32xf32>
    %cst_99 = arith.constant 1.000000e+00 : f32
    %538 = vector.broadcast %cst_99 : f32 to vector<2x32xf32>
    %539 = arith.addf %538, %537 : vector<2x32xf32>
    %540 = arith.divf %538, %539 : vector<2x32xf32>
    %541 = vector.extract_strided_slice %530 {offsets = [0, 32], sizes = [2, 32], strides = [1, 1]} : vector<2x96xf32> to vector<2x32xf32>
    %542 = vector.extract_strided_slice %532 {offsets = [0, 32], sizes = [2, 32], strides = [1, 1]} : vector<2x96xf32> to vector<2x32xf32>
    %543 = arith.addf %541, %542 : vector<2x32xf32>
    %544 = arith.negf %543 : vector<2x32xf32>
    %545 = math.exp %544 : vector<2x32xf32>
    %cst_100 = arith.constant 1.000000e+00 : f32
    %546 = vector.broadcast %cst_100 : f32 to vector<2x32xf32>
    %547 = arith.addf %546, %545 : vector<2x32xf32>
    %548 = arith.divf %546, %547 : vector<2x32xf32>
    %549 = vector.extract_strided_slice %530 {offsets = [0, 64], sizes = [2, 32], strides = [1, 1]} : vector<2x96xf32> to vector<2x32xf32>
    %550 = vector.extract_strided_slice %532 {offsets = [0, 64], sizes = [2, 32], strides = [1, 1]} : vector<2x96xf32> to vector<2x32xf32>
    %551 = vector.broadcast %11 : vector<1x32xf32> to vector<2x32xf32>
    %552 = arith.addf %550, %551 : vector<2x32xf32>
    %553 = arith.mulf %540, %552 : vector<2x32xf32>
    %554 = arith.addf %549, %553 : vector<2x32xf32>
    %555 = math.tanh %554 : vector<2x32xf32>
    %cst_101 = arith.constant 1.000000e+00 : f32
    %556 = vector.broadcast %cst_101 : f32 to vector<2x32xf32>
    %557 = arith.subf %556, %548 : vector<2x32xf32>
    %558 = arith.mulf %557, %555 : vector<2x32xf32>
    %559 = arith.mulf %548, %498 : vector<2x32xf32>
    %560 = arith.addf %558, %559 : vector<2x32xf32>
    %cst_102 = arith.constant 0.000000e+00 : f32
    %561 = vector.shape_cast %26 : vector<2x1xi1> to vector<2x1xi1>
    %562 = vector.broadcast %561 : vector<2x1xi1> to vector<2x32xi1>
    %563 = vector.broadcast %cst_102 : f32 to vector<2x32xf32>
    %564 = arith.select %562, %529, %563 : vector<2x32xi1>, vector<2x32xf32>
    %c12_103 = arith.constant 12 : index
    %c0_104 = arith.constant 0 : index
    %565 = vector.load %arg11[%c12_103, %c0_104] : memref<16x32xf32, #tpu.memory_space<vmem>>, vector<2x32xf32>
    tpu.vector_store %arg11[%c12_103, %c0_104], %564 {strides = array<i32>} : memref<16x32xf32, #tpu.memory_space<vmem>>, vector<2x32xf32>,
    %cst_105 = arith.constant 0.000000e+00 : f32
    %566 = vector.shape_cast %16 : vector<2x1xi1> to vector<2x1xi1>
    %567 = vector.broadcast %566 : vector<2x1xi1> to vector<2x32xi1>
    %568 = vector.broadcast %cst_105 : f32 to vector<2x32xf32>
    %569 = arith.select %567, %560, %568 : vector<2x32xi1>, vector<2x32xf32>
    %c2_106 = arith.constant 2 : index
    %c0_107 = arith.constant 0 : index
    %570 = vector.load %arg12[%c2_106, %c0_107] : memref<16x32xf32, #tpu.memory_space<vmem>>, vector<2x32xf32>
    tpu.vector_store %arg12[%c2_106, %c0_107], %569 {strides = array<i32>} : memref<16x32xf32, #tpu.memory_space<vmem>>, vector<2x32xf32>,
    %571 = vector.shape_cast %26 : vector<2x1xi1> to vector<2x1xi1>
    %572 = vector.broadcast %571 : vector<2x1xi1> to vector<2x32xi1>
    %573 = arith.select %572, %529, %495 : vector<2x32xi1>, vector<2x32xf32>
    %574 = vector.shape_cast %16 : vector<2x1xi1> to vector<2x1xi1>
    %575 = vector.broadcast %574 : vector<2x1xi1> to vector<2x32xi1>
    %576 = arith.select %575, %560, %498 : vector<2x32xi1>, vector<2x32xf32>
    %577 = vector.extract_strided_slice %6 {offsets = [14, 0], sizes = [2, 96], strides = [1, 1]} : vector<16x96xf32> to vector<2x96xf32>
    %578 = arith.truncf %573 : vector<2x32xf32> to vector<2x32xbf16>
    %cst_108 = arith.constant dense<0.000000e+00> : vector<2x96xf32>
    %579 = tpu.matmul %578, %8, %cst_108 {dimension_numbers = #tpu.dot_dimension_numbers<[1], [0], [0], [1], [0, 0, 1, 1], [], []>} : vector<2x32xbf16>, vector<32x96xbf16>, vector<2x96xf32> -> vector<2x96xf32>
    %580 = vector.extract_strided_slice %577 {offsets = [0, 0], sizes = [2, 32], strides = [1, 1]} : vector<2x96xf32> to vector<2x32xf32>
    %581 = vector.extract_strided_slice %579 {offsets = [0, 0], sizes = [2, 32], strides = [1, 1]} : vector<2x96xf32> to vector<2x32xf32>
    %582 = arith.addf %580, %581 : vector<2x32xf32>
    %583 = arith.negf %582 : vector<2x32xf32>
    %584 = math.exp %583 : vector<2x32xf32>
    %cst_109 = arith.constant 1.000000e+00 : f32
    %585 = vector.broadcast %cst_109 : f32 to vector<2x32xf32>
    %586 = arith.addf %585, %584 : vector<2x32xf32>
    %587 = arith.divf %585, %586 : vector<2x32xf32>
    %588 = vector.extract_strided_slice %577 {offsets = [0, 32], sizes = [2, 32], strides = [1, 1]} : vector<2x96xf32> to vector<2x32xf32>
    %589 = vector.extract_strided_slice %579 {offsets = [0, 32], sizes = [2, 32], strides = [1, 1]} : vector<2x96xf32> to vector<2x32xf32>
    %590 = arith.addf %588, %589 : vector<2x32xf32>
    %591 = arith.negf %590 : vector<2x32xf32>
    %592 = math.exp %591 : vector<2x32xf32>
    %cst_110 = arith.constant 1.000000e+00 : f32
    %593 = vector.broadcast %cst_110 : f32 to vector<2x32xf32>
    %594 = arith.addf %593, %592 : vector<2x32xf32>
    %595 = arith.divf %593, %594 : vector<2x32xf32>
    %596 = vector.extract_strided_slice %577 {offsets = [0, 64], sizes = [2, 32], strides = [1, 1]} : vector<2x96xf32> to vector<2x32xf32>
    %597 = vector.extract_strided_slice %579 {offsets = [0, 64], sizes = [2, 32], strides = [1, 1]} : vector<2x96xf32> to vector<2x32xf32>
    %598 = vector.broadcast %10 : vector<1x32xf32> to vector<2x32xf32>
    %599 = arith.addf %597, %598 : vector<2x32xf32>
    %600 = arith.mulf %587, %599 : vector<2x32xf32>
    %601 = arith.addf %596, %600 : vector<2x32xf32>
    %602 = math.tanh %601 : vector<2x32xf32>
    %cst_111 = arith.constant 1.000000e+00 : f32
    %603 = vector.broadcast %cst_111 : f32 to vector<2x32xf32>
    %604 = arith.subf %603, %595 : vector<2x32xf32>
    %605 = arith.mulf %604, %602 : vector<2x32xf32>
    %606 = arith.mulf %595, %573 : vector<2x32xf32>
    %607 = arith.addf %605, %606 : vector<2x32xf32>
    %608 = vector.extract_strided_slice %7 {offsets = [0, 0], sizes = [2, 96], strides = [1, 1]} : vector<16x96xf32> to vector<2x96xf32>
    %609 = arith.truncf %576 : vector<2x32xf32> to vector<2x32xbf16>
    %cst_112 = arith.constant dense<0.000000e+00> : vector<2x96xf32>
    %610 = tpu.matmul %609, %9, %cst_112 {dimension_numbers = #tpu.dot_dimension_numbers<[1], [0], [0], [1], [0, 0, 1, 1], [], []>} : vector<2x32xbf16>, vector<32x96xbf16>, vector<2x96xf32> -> vector<2x96xf32>
    %611 = vector.extract_strided_slice %608 {offsets = [0, 0], sizes = [2, 32], strides = [1, 1]} : vector<2x96xf32> to vector<2x32xf32>
    %612 = vector.extract_strided_slice %610 {offsets = [0, 0], sizes = [2, 32], strides = [1, 1]} : vector<2x96xf32> to vector<2x32xf32>
    %613 = arith.addf %611, %612 : vector<2x32xf32>
    %614 = arith.negf %613 : vector<2x32xf32>
    %615 = math.exp %614 : vector<2x32xf32>
    %cst_113 = arith.constant 1.000000e+00 : f32
    %616 = vector.broadcast %cst_113 : f32 to vector<2x32xf32>
    %617 = arith.addf %616, %615 : vector<2x32xf32>
    %618 = arith.divf %616, %617 : vector<2x32xf32>
    %619 = vector.extract_strided_slice %608 {offsets = [0, 32], sizes = [2, 32], strides = [1, 1]} : vector<2x96xf32> to vector<2x32xf32>
    %620 = vector.extract_strided_slice %610 {offsets = [0, 32], sizes = [2, 32], strides = [1, 1]} : vector<2x96xf32> to vector<2x32xf32>
    %621 = arith.addf %619, %620 : vector<2x32xf32>
    %622 = arith.negf %621 : vector<2x32xf32>
    %623 = math.exp %622 : vector<2x32xf32>
    %cst_114 = arith.constant 1.000000e+00 : f32
    %624 = vector.broadcast %cst_114 : f32 to vector<2x32xf32>
    %625 = arith.addf %624, %623 : vector<2x32xf32>
    %626 = arith.divf %624, %625 : vector<2x32xf32>
    %627 = vector.extract_strided_slice %608 {offsets = [0, 64], sizes = [2, 32], strides = [1, 1]} : vector<2x96xf32> to vector<2x32xf32>
    %628 = vector.extract_strided_slice %610 {offsets = [0, 64], sizes = [2, 32], strides = [1, 1]} : vector<2x96xf32> to vector<2x32xf32>
    %629 = vector.broadcast %11 : vector<1x32xf32> to vector<2x32xf32>
    %630 = arith.addf %628, %629 : vector<2x32xf32>
    %631 = arith.mulf %618, %630 : vector<2x32xf32>
    %632 = arith.addf %627, %631 : vector<2x32xf32>
    %633 = math.tanh %632 : vector<2x32xf32>
    %cst_115 = arith.constant 1.000000e+00 : f32
    %634 = vector.broadcast %cst_115 : f32 to vector<2x32xf32>
    %635 = arith.subf %634, %626 : vector<2x32xf32>
    %636 = arith.mulf %635, %633 : vector<2x32xf32>
    %637 = arith.mulf %626, %576 : vector<2x32xf32>
    %638 = arith.addf %636, %637 : vector<2x32xf32>
    %cst_116 = arith.constant 0.000000e+00 : f32
    %639 = vector.shape_cast %28 : vector<2x1xi1> to vector<2x1xi1>
    %640 = vector.broadcast %639 : vector<2x1xi1> to vector<2x32xi1>
    %641 = vector.broadcast %cst_116 : f32 to vector<2x32xf32>
    %642 = arith.select %640, %607, %641 : vector<2x32xi1>, vector<2x32xf32>
    %c14_117 = arith.constant 14 : index
    %c0_118 = arith.constant 0 : index
    %643 = vector.load %arg11[%c14_117, %c0_118] : memref<16x32xf32, #tpu.memory_space<vmem>>, vector<2x32xf32>
    tpu.vector_store %arg11[%c14_117, %c0_118], %642 {strides = array<i32>} : memref<16x32xf32, #tpu.memory_space<vmem>>, vector<2x32xf32>,
    %cst_119 = arith.constant 0.000000e+00 : f32
    %644 = vector.shape_cast %14 : vector<2x1xi1> to vector<2x1xi1>
    %645 = vector.broadcast %644 : vector<2x1xi1> to vector<2x32xi1>
    %646 = vector.broadcast %cst_119 : f32 to vector<2x32xf32>
    %647 = arith.select %645, %638, %646 : vector<2x32xi1>, vector<2x32xf32>
    %c0_120 = arith.constant 0 : index
    %c0_121 = arith.constant 0 : index
    %648 = vector.load %arg12[%c0_120, %c0_121] : memref<16x32xf32, #tpu.memory_space<vmem>>, vector<2x32xf32>
    tpu.vector_store %arg12[%c0_120, %c0_121], %647 {strides = array<i32>} : memref<16x32xf32, #tpu.memory_space<vmem>>, vector<2x32xf32>,
    %649 = vector.shape_cast %28 : vector<2x1xi1> to vector<2x1xi1>
    %650 = vector.broadcast %649 : vector<2x1xi1> to vector<2x32xi1>
    %651 = arith.select %650, %607, %573 : vector<2x32xi1>, vector<2x32xf32>
    %652 = vector.shape_cast %14 : vector<2x1xi1> to vector<2x1xi1>
    %653 = vector.broadcast %652 : vector<2x1xi1> to vector<2x32xi1>
    %654 = arith.select %653, %638, %576 : vector<2x32xi1>, vector<2x32xf32>
    %c0_122 = arith.constant 0 : index
    %c0_123 = arith.constant 0 : index
    %655 = vector.load %arg8[%c0_122, %c0_123] : memref<32x32xf32, #tpu.memory_space<vmem>>, vector<32x32xf32>
    %cst_124 = arith.constant dense<0.000000e+00> : vector<2x32xf32>
    %656 = tpu.matmul %651, %655, %cst_124 {dimension_numbers = #tpu.dot_dimension_numbers<[1], [0], [0], [1], [0, 0, 1, 1], [], []>} : vector<2x32xf32>, vector<32x32xf32>, vector<2x32xf32> -> vector<2x32xf32>
    %c0_125 = arith.constant 0 : index
    %c0_126 = arith.constant 0 : index
    %657 = vector.load %arg9[%c0_125, %c0_126] : memref<32x32xf32, #tpu.memory_space<vmem>>, vector<32x32xf32>
    %cst_127 = arith.constant dense<0.000000e+00> : vector<2x32xf32>
    %658 = tpu.matmul %654, %657, %cst_127 {dimension_numbers = #tpu.dot_dimension_numbers<[1], [0], [0], [1], [0, 0, 1, 1], [], []>} : vector<2x32xf32>, vector<32x32xf32>, vector<2x32xf32> -> vector<2x32xf32>
    %659 = arith.addf %656, %658 : vector<2x32xf32>
    %c0_128 = arith.constant 0 : index
    %c0_129 = arith.constant 0 : index
    %660 = vector.load %arg10[%c0_128, %c0_129] : memref<1x32xf32, #tpu.memory_space<vmem>>, vector<1x32xf32>
    %661 = vector.broadcast %660 : vector<1x32xf32> to vector<2x32xf32>
    %662 = arith.addf %659, %661 : vector<2x32xf32>
    %663 = math.tanh %662 : vector<2x32xf32>
    %c0_130 = arith.constant 0 : index
    %c0_131 = arith.constant 0 : index
    %664 = vector.load %arg13[%c0_130, %c0_131] : memref<2x32xf32, #tpu.memory_space<vmem>>, vector<2x32xf32>
    tpu.vector_store %arg13[%c0_130, %c0_131], %663 {strides = array<i32>} : memref<2x32xf32, #tpu.memory_space<vmem>>, vector<2x32xf32>,
    return
  }
}

</mosaic_0001>

<llo_original>
// kernel: tpu_custom_call.1
$region0: #{tpu_custom_call.1}
  #allocation0 [shape = 'u32[]', space=smem, size = 0x4, offset = 0x4, fixed_abs, tag = 'smem constant byte address 0x4 - core index']
  #allocation1 [shape = 'u32[144,128]{1,0:T(1,128)}', space=vmem, size = 0x12000, scoped, tag = 'internal scratch']
  %s0 = inlined_call_operand.hbm [shape: bf16[16,32], index: 0, kind: input, shape index: {}]
  %s1 = inlined_call_operand.vmem [shape: s32[2,1], index: 1, kind: input, shape index: {}]
  %s2 = inlined_call_operand.hbm [shape: bf16[32,192], index: 2, kind: input, shape index: {}]
  %s3 = inlined_call_operand.vmem [shape: f32[1,192], index: 3, kind: input, shape index: {}]
  %s4 = inlined_call_operand.hbm [shape: bf16[32,96], index: 4, kind: input, shape index: {}]
  %s5 = inlined_call_operand.hbm [shape: bf16[32,96], index: 5, kind: input, shape index: {}]
  %s6 = inlined_call_operand.hbm [shape: f32[1,32], index: 6, kind: input, shape index: {}]
  %s7 = inlined_call_operand.hbm [shape: f32[1,32], index: 7, kind: input, shape index: {}]
  %s8 = inlined_call_operand.vmem [shape: f32[32,32], index: 8, kind: input, shape index: {}]
  %s9 = inlined_call_operand.hbm [shape: f32[32,32], index: 9, kind: input, shape index: {}]
  %s10 = inlined_call_operand.vmem [shape: f32[1,32], index: 10, kind: input, shape index: {}]
  %s11 = inlined_call_operand.hbm [shape: f32[16,32], index: 11, kind: output, shape index: {0}]
  %s12 = inlined_call_operand.hbm [shape: f32[16,32], index: 12, kind: output, shape index: {1}]
  %s13 = inlined_call_operand.hbm [shape: f32[2,32], index: 13, kind: output, shape index: {2}]
  %14 = xla_tuple %s11, %s12, %s13
  %s15 = sld [smem:[#allocation0]]
  $region98: #{tpu_custom_call.1} parent=0
    _
  %s17 = ssub.s32 1, %s15
  %s18 = scalar_select 0, %s17, %s15
  $region1: #{tpu_custom_call.1} parent=0
    #allocation2 [shape = 'u8[4096]{0}', space=vmem, size = 0x1000, scoped, tag = 'input window, operand 0, single buffered']
    #allocation3 [shape = 's32[1]{0}', space=sflag, size = 0x4, scoped, tag = 'scoped memory for tpu_custom_call.1']
    #allocation4 [shape = 's32[1]{0}', space=sflag, size = 0x4, scoped, tag = 'scoped memory for tpu_custom_call.1']
    #allocation5 [shape = 'u8[16384]{0}', space=vmem, size = 0x4000, scoped, tag = 'input window, operand 2, single buffered']
    #allocation6 [shape = 's32[1]{0}', space=sflag, size = 0x4, scoped, tag = 'scoped memory for tpu_custom_call.1']
    #allocation7 [shape = 'u8[8192]{0}', space=vmem, size = 0x2000, scoped, tag = 'input window, operand 4, single buffered']
    #allocation8 [shape = 'u8[8192]{0}', space=vmem, size = 0x2000, scoped, tag = 'input window, operand 5, single buffered']
    #allocation9 [shape = 's32[1]{0}', space=sflag, size = 0x4, scoped, tag = 'scoped memory for tpu_custom_call.1']
    #allocation10 [shape = 'u8[512]{0}', space=vmem, size = 0x400, scoped, tag = 'input window, operand 6, single buffered']
    #allocation11 [shape = 'u8[512]{0}', space=vmem, size = 0x400, scoped, tag = 'input window, operand 7, single buffered']
    #allocation12 [shape = 's32[1]{0}', space=sflag, size = 0x4, scoped, tag = 'scoped memory for tpu_custom_call.1']
    #allocation13 [shape = 'u8[16384]{0}', space=vmem, size = 0x4000, scoped, tag = 'input window, operand 9, single buffered']
    #allocation14 [shape = 'u8[8192]{0}', space=vmem, size = 0x2000, scoped, tag = 'output window, operand 0, single buffered']
    #allocation15 [shape = 'u8[8192]{0}', space=vmem, size = 0x2000, scoped, tag = 'output window, operand 1, single buffered']
    #allocation16 [shape = 's32[1]{0}', space=sflag, size = 0x4, scoped, tag = 'scoped memory for tpu_custom_call.1']
    #allocation17 [shape = 'u8[1024]{0}', space=vmem, size = 0x400, scoped, tag = 'output window, operand 2, single buffered']
    %19 = vsyncpa [#allocation3], 0
    %20 = vsyncpa [#allocation6], 0
    %21 = vsyncpa [#allocation9], 0
    %22 = vsyncpa [#allocation12], 0
    %23 = vsyncpa [#allocation4], 0
    %24 = vsyncpa [#allocation16], 0
    // Predicated region
    $region2: #{tpu_custom_call.1} parent=1 // pred_check
      _
    $region3: #{tpu_custom_call.1} parent=1 // pred_check_branch
      %26 = sbr.rel (0) target = $region5
    $region4: #{tpu_custom_call.1} parent=1 // pred_region
      %s28 = ssub.s32 128, 128
      %29 = vsyncadd [#allocation3], %s28
      %s30 = sshll.u32 [#allocation2], 4
      %s31 = int_to_ptr.vmem [resolvable:$true] %s30
      %36 = dma.hbm_to_vmem [thread:$0]  %s0, 128, %s31, [#allocation3], 64, 64, 4
    $region5: #{tpu_custom_call.1} parent=1 // pred_fallthru
      _
    // Predicated region
    $region6: #{tpu_custom_call.1} parent=1 // pred_check
      _
    $region7: #{tpu_custom_call.1} parent=1 // pred_check_branch
      %38 = sbr.rel (0) target = $region9
    $region8: #{tpu_custom_call.1} parent=1 // pred_region
      _
    $region9: #{tpu_custom_call.1} parent=1 // pred_fallthru
      _
    // Predicated region
    $region10: #{tpu_custom_call.1} parent=1 // pred_check
      _
    $region11: #{tpu_custom_call.1} parent=1 // pred_check_branch
      %40 = sbr.rel (0) target = $region13
    $region12: #{tpu_custom_call.1} parent=1 // pred_region
      %s42 = ssub.s32 512, 512
      %43 = vsyncadd [#allocation6], %s42
      %s44 = sshll.u32 [#allocation5], 4
      %s45 = int_to_ptr.vmem [resolvable:$true] %s44
      %50 = dma.hbm_to_vmem [thread:$0]  %s2, 512, %s45, [#allocation6], 128, 128, 8
    $region13: #{tpu_custom_call.1} parent=1 // pred_fallthru
      _
    // Predicated region
    $region14: #{tpu_custom_call.1} parent=1 // pred_check
      _
    $region15: #{tpu_custom_call.1} parent=1 // pred_check_branch
      %52 = sbr.rel (0) target = $region17
    $region16: #{tpu_custom_call.1} parent=1 // pred_region
      _
    $region17: #{tpu_custom_call.1} parent=1 // pred_fallthru
      _
    // Predicated region
    $region18: #{tpu_custom_call.1} parent=1 // pred_check
      _
    $region19: #{tpu_custom_call.1} parent=1 // pred_check_branch
      %54 = sbr.rel (0) target = $region21
    $region20: #{tpu_custom_call.1} parent=1 // pred_region
      %s56 = ssub.s32 256, 256
      %57 = vsyncadd [#allocation6], %s56
      %s58 = sshll.u32 [#allocation7], 4
      %s59 = int_to_ptr.vmem [resolvable:$true] %s58
      %64 = dma.hbm_to_vmem [thread:$0]  %s4, 256, %s59, [#allocation6], 64, 64, 4
    $region21: #{tpu_custom_call.1} parent=1 // pred_fallthru
      _
    // Predicated region
    $region22: #{tpu_custom_call.1} parent=1 // pred_check
      _
    $region23: #{tpu_custom_call.1} parent=1 // pred_check_branch
      %66 = sbr.rel (0) target = $region25
    $region24: #{tpu_custom_call.1} parent=1 // pred_region
      %s68 = ssub.s32 256, 256
      %69 = vsyncadd [#allocation9], %s68
      %s70 = sshll.u32 [#allocation8], 4
      %s71 = int_to_ptr.vmem [resolvable:$true] %s70
      %76 = dma.hbm_to_vmem [thread:$0]  %s5, 256, %s71, [#allocation9], 64, 64, 4
    $region25: #{tpu_custom_call.1} parent=1 // pred_fallthru
      _
    // Predicated region
    $region26: #{tpu_custom_call.1} parent=1 // pred_check
      _
    $region27: #{tpu_custom_call.1} parent=1 // pred_check_branch
      %78 = sbr.rel (0) target = $region29
    $region28: #{tpu_custom_call.1} parent=1 // pred_region
      %s80 = ssub.s32 16, 16
      %81 = vsyncadd [#allocation9], %s80
      %s83 = sshll.u32 [#allocation10], 4
      %s84 = int_to_ptr.vmem [resolvable:$true] %s83
      %86 = dma.hbm_to_vmem [thread:$0]  %s6, 16, %s84, [#allocation9]
    $region29: #{tpu_custom_call.1} parent=1 // pred_fallthru
      _
    // Predicated region
    $region30: #{tpu_custom_call.1} parent=1 // pred_check
      _
    $region31: #{tpu_custom_call.1} parent=1 // pred_check_branch
      %88 = sbr.rel (0) target = $region33
    $region32: #{tpu_custom_call.1} parent=1 // pred_region
      %s90 = ssub.s32 16, 16
      %91 = vsyncadd [#allocation12], %s90
      %s93 = sshll.u32 [#allocation11], 4
      %s94 = int_to_ptr.vmem [resolvable:$true] %s93
      %96 = dma.hbm_to_vmem [thread:$0]  %s7, 16, %s94, [#allocation12]
    $region33: #{tpu_custom_call.1} parent=1 // pred_fallthru
      _
    // Predicated region
    $region34: #{tpu_custom_call.1} parent=1 // pred_check
      _
    $region35: #{tpu_custom_call.1} parent=1 // pred_check_branch
      %98 = sbr.rel (0) target = $region37
    $region36: #{tpu_custom_call.1} parent=1 // pred_region
      _
    $region37: #{tpu_custom_call.1} parent=1 // pred_fallthru
      _
    // Predicated region
    $region38: #{tpu_custom_call.1} parent=1 // pred_check
      _
    $region39: #{tpu_custom_call.1} parent=1 // pred_check_branch
      %100 = sbr.rel (0) target = $region41
    $region40: #{tpu_custom_call.1} parent=1 // pred_region
      %s102 = ssub.s32 512, 512
      %103 = vsyncadd [#allocation12], %s102
      %s104 = sshll.u32 [#allocation13], 4
      %s105 = int_to_ptr.vmem [resolvable:$true] %s104
      %110 = dma.hbm_to_vmem [thread:$0]  %s9, 512, %s105, [#allocation12], 128, 128, 8
    $region41: #{tpu_custom_call.1} parent=1 // pred_fallthru
      _
    // Predicated region
    $region42: #{tpu_custom_call.1} parent=1 // pred_check
      _
    $region43: #{tpu_custom_call.1} parent=1 // pred_check_branch
      %112 = sbr.rel (0) target = $region45
    $region44: #{tpu_custom_call.1} parent=1 // pred_region
      _
    $region45: #{tpu_custom_call.1} parent=1 // pred_fallthru
      _
    // Predicated region
    $region46: #{tpu_custom_call.1} parent=1 // pred_check
      _
    $region47: #{tpu_custom_call.1} parent=1 // pred_check_branch
      %114 = sbr.rel (0) target = $region49
    $region48: #{tpu_custom_call.1} parent=1 // pred_region
      %115 = dma.done [#allocation3], 128
    $region49: #{tpu_custom_call.1} parent=1 // pred_fallthru
      _
    // Predicated region
    $region50: #{tpu_custom_call.1} parent=1 // pred_check
      _
    $region51: #{tpu_custom_call.1} parent=1 // pred_check_branch
      %117 = sbr.rel (0) target = $region53
    $region52: #{tpu_custom_call.1} parent=1 // pred_region
      %118 = dma.done [#allocation6], 512
    $region53: #{tpu_custom_call.1} parent=1 // pred_fallthru
      _
    // Predicated region
    $region54: #{tpu_custom_call.1} parent=1 // pred_check
      _
    $region55: #{tpu_custom_call.1} parent=1 // pred_check_branch
      %120 = sbr.rel (0) target = $region57
    $region56: #{tpu_custom_call.1} parent=1 // pred_region
      %121 = dma.done [#allocation6], 256
    $region57: #{tpu_custom_call.1} parent=1 // pred_fallthru
      _
    // Predicated region
    $region58: #{tpu_custom_call.1} parent=1 // pred_check
      _
    $region59: #{tpu_custom_call.1} parent=1 // pred_check_branch
      %123 = sbr.rel (0) target = $region61
    $region60: #{tpu_custom_call.1} parent=1 // pred_region
      %124 = dma.done [#allocation9], 256
    $region61: #{tpu_custom_call.1} parent=1 // pred_fallthru
      _
    // Predicated region
    $region62: #{tpu_custom_call.1} parent=1 // pred_check
      _
    $region63: #{tpu_custom_call.1} parent=1 // pred_check_branch
      %126 = sbr.rel (0) target = $region65
    $region64: #{tpu_custom_call.1} parent=1 // pred_region
      %127 = dma.done [#allocation9], 16
    $region65: #{tpu_custom_call.1} parent=1 // pred_fallthru
      _
    // Predicated region
    $region66: #{tpu_custom_call.1} parent=1 // pred_check
      _
    $region67: #{tpu_custom_call.1} parent=1 // pred_check_branch
      %129 = sbr.rel (0) target = $region69
    $region68: #{tpu_custom_call.1} parent=1 // pred_region
      %130 = dma.done [#allocation12], 16
    $region69: #{tpu_custom_call.1} parent=1 // pred_fallthru
      _
    // Predicated region
    $region70: #{tpu_custom_call.1} parent=1 // pred_check
      _
    $region71: #{tpu_custom_call.1} parent=1 // pred_check_branch
      %132 = sbr.rel (0) target = $region73
    $region72: #{tpu_custom_call.1} parent=1 // pred_region
      %133 = dma.done [#allocation12], 512
    $region73: #{tpu_custom_call.1} parent=1 // pred_fallthru
      _
    %v135 = vld [vmem:[#allocation2] sm:$0xf]
    %v136 = vld [vmem:[#allocation2 + $0x4] sm:$0xf]
    %v137 = vld [vmem:[#allocation5] sm:$0xff]
    %v138 = vld [vmem:[#allocation5 + $0x8] sm:$0xff]
    %v139 = vld [vmem:[#allocation5 + $0x10] sm:$0xff]
    %v140 = vld [vmem:[#allocation5 + $0x18] sm:$0xff]
    %v141 = vld [vmem:[%s3] sm:$0x3]
    %v143 = vlaneseq
    %v144 = vshrl.u32 %v143, 7
    %v145 = vsub.s32 0, %v144
    %v146 = vrot.slane %v141, %v145
    %v147 = vlaneseq
    %v148 = vshrl.u32 %v147, 7
    %v149 = vsub.s32 1, %v148
    %v150 = vrot.slane %v141, %v149
    %v155 = vunpack.c.l.b16 %v135
    %v156 = vunpack.c.l.b16 %v136
    %v157 = vpack.c.b16 %v156, %v155
    %v162 = vunpack.c.l.b16 %v137
    %v163 = vunpack.c.h.b16 %v137
    %v164 = vunpack.c.l.b16 %v138
    %v165 = vunpack.c.h.b16 %v138
    %v166 = vunpack.c.l.b16 %v139
    %v167 = vunpack.c.h.b16 %v139
    %v168 = vunpack.c.l.b16 %v140
    %v169 = vunpack.c.h.b16 %v140
    %v170 = vpack.c.b16 %v164, %v162
    %v171 = vpack.c.b16 %v165, %v163
    %v172 = vpack.c.b16 %v168, %v166
    %v173 = vpack.c.b16 %v169, %v167
    %vm178 = vcmask 261120
    %v180 = vsel %vm178, %v157, 0
    %182 = vmatprep.subr.bf16.mxu0 %v171
    %183 = vmatpush1.bf16.msra.mxu0 %v170
    %184 = vmatprep.subr.bf16.mxu0 %v173
    %185 = vmatpush1.bf16.msra.mxu0 %v172
    %186 = vmatprep.subr.bf16.mxu0 0
    %187 = vmatpush1.bf16.msra.mxu0 0
    %188 = vmatprep.subr.bf16.mxu0 0
    %189 = vmatpush1.bf16.msra.mxu0 0
    %190 = vmatprep.subr.bf16.mxu0 0
    %191 = vmatpush1.bf16.msra.mxu0 0
    %192 = vmatprep.subr.bf16.mxu0 0
    %193 = vmatpush1.bf16.msra.mxu0 0
    %194 = vmatprep.subr.bf16.mxu0 0
    %195 = vmatpush1.bf16.msra.mxu0 0
    %196 = vmatprep.subr.bf16.mxu0 0
    %197 = vmatpush1.bf16.msra.mxu0 0
    %198 = vmatprep.subr.bf16.mxu0 0
    %199 = vmatpush1.bf16.msra.mxu0 0
    %200 = vmatprep.subr.bf16.mxu0 0
    %201 = vmatpush1.bf16.msra.mxu0 0
    %202 = vmatprep.subr.bf16.mxu0 0
    %203 = vmatpush1.bf16.msra.mxu0 0
    %204 = vmatprep.subr.bf16.mxu0 0
    %205 = vmatpush1.bf16.msra.mxu0 0
    %206 = vmatprep.subr.bf16.mxu0 0
    %207 = vmatpush1.bf16.msra.mxu0 0
    %208 = vmatprep.subr.bf16.mxu0 0
    %209 = vmatpush1.bf16.msra.mxu0 0
    %210 = vmatprep.subr.bf16.mxu0 0
    %211 = vmatpush1.bf16.msra.mxu0 0
    %212 = vmatprep.subr.bf16.mxu0 0
    %213 = vmatpush1.bf16.msra.mxu0 0
    %214 = vmatprep.mubr.bf16.mxu0 0
    %215 = vmatmul.mubr.bf16.gmra.mrb[0].mxu0 %v180
    %v216 = vpop.f32.mrb[0].mxu0
    %v217 = vadd.f32 %v146, %v216
    %v218 = vpop.f32.mrb[0].mxu0
    %v219 = vadd.f32 %v150, %v218
    %v220 = vpop.f32.mrb[0].mxu0
    %v221 = vadd.f32 %v146, %v220
    %v222 = vpop.f32.mrb[0].mxu0
    %v223 = vadd.f32 %v150, %v222
    %224 = vdwg.mxu0
    %v225 = vld [vmem:[#allocation7] sm:$0xf]
    %v226 = vld [vmem:[#allocation7 + $0x4] sm:$0xf]
    %v227 = vld [vmem:[#allocation7 + $0x8] sm:$0xf]
    %v228 = vld [vmem:[#allocation7 + $0xc] sm:$0xf]
    %v229 = vld [vmem:[#allocation8] sm:$0xf]
    %v230 = vld [vmem:[#allocation8 + $0x4] sm:$0xf]
    %v231 = vld [vmem:[#allocation8 + $0x8] sm:$0xf]
    %v232 = vld [vmem:[#allocation8 + $0xc] sm:$0xf]
    %v233 = vld [vmem:[#allocation10] sm:$0x1]
    %v234 = vld [vmem:[#allocation11] sm:$0x1]
    %v235 = vld [vmem:[%s1] sm:$0x3]
    %vm236 = vcmp.gt.s32.totalorder %v235, 0
    %vm237 = vcmp.gt.s32.totalorder %v235, 1
    %vm238 = vcmp.gt.s32.totalorder %v235, 2
    %vm239 = vcmp.gt.s32.totalorder %v235, 3
    %vm240 = vcmp.gt.s32.totalorder %v235, 4
    %vm241 = vcmp.gt.s32.totalorder %v235, 5
    %vm242 = vcmp.gt.s32.totalorder %v235, 6
    %vm243 = vcmp.gt.s32.totalorder %v235, 7
    %v248 = vunpack.c.l.b16 %v225
    %v249 = vunpack.c.l.b16 %v226
    %v250 = vunpack.c.l.b16 %v227
    %v251 = vunpack.c.l.b16 %v228
    %v252 = vpack.c.b16 %v249, %v248
    %v253 = vpack.c.b16 %v251, %v250
    %v257 = vsel %vm178, 0, 0
    %259 = vmatprep.subr.bf16.mxu0 0
    %260 = vmatpush1.bf16.msra.mxu0 %v252
    %261 = vmatprep.subr.bf16.mxu0 0
    %262 = vmatpush1.bf16.msra.mxu0 %v253
    %263 = vmatprep.subr.bf16.mxu0 0
    %264 = vmatpush1.bf16.msra.mxu0 0
    %265 = vmatprep.subr.bf16.mxu0 0
    %266 = vmatpush1.bf16.msra.mxu0 0
    %267 = vmatprep.subr.bf16.mxu0 0
    %268 = vmatpush1.bf16.msra.mxu0 0
    %269 = vmatprep.subr.bf16.mxu0 0
    %270 = vmatpush1.bf16.msra.mxu0 0
    %271 = vmatprep.subr.bf16.mxu0 0
    %272 = vmatpush1.bf16.msra.mxu0 0
    %273 = vmatprep.subr.bf16.mxu0 0
    %274 = vmatpush1.bf16.msra.mxu0 0
    %275 = vmatprep.subr.bf16.mxu0 0
    %276 = vmatpush1.bf16.msra.mxu0 0
    %277 = vmatprep.subr.bf16.mxu0 0
    %278 = vmatpush1.bf16.msra.mxu0 0
    %279 = vmatprep.subr.bf16.mxu0 0
    %280 = vmatpush1.bf16.msra.mxu0 0
    %281 = vmatprep.subr.bf16.mxu0 0
    %282 = vmatpush1.bf16.msra.mxu0 0
    %283 = vmatprep.subr.bf16.mxu0 0
    %284 = vmatpush1.bf16.msra.mxu0 0
    %285 = vmatprep.subr.bf16.mxu0 0
    %286 = vmatpush1.bf16.msra.mxu0 0
    %287 = vmatprep.subr.bf16.mxu0 0
    %288 = vmatpush1.bf16.msra.mxu0 0
    %289 = vmatprep.subr.bf16.mxu0 0
    %290 = vmatpush1.bf16.msra.mxu0 0
    %291 = vmatprep.mubr.bf16.mxu0 0
    %292 = vmatmul.mubr.bf16.gmra.mrb[0].mxu0 %v257
    %v293 = vpop.f32.mrb[0].mxu0
    %v294 = vadd.f32 0.0, %v293
    %v295 = vpop.f32.mrb[0].mxu0
    %v296 = vpop.f32.mrb[0].mxu0
    %v297 = vpop.f32.mrb[0].mxu0
    %298 = vdwg.mxu0
    %v299 = vadd.f32 %v217, %v294
    %v300 = vxor.u32 %v299, 2147483648
    %v301 = vmul.f32 %v300, 1.442695
    %v302 = vpow.pop %v301
    %v303 = vadd.f32 %v302, 1.0
    %v304 = vrcp.pop %v303
    %v305 = vmul.f32 1.0, %v304
    %v307 = vlaneseq
    %v308 = vshrl.u32 %v307, 7
    %v309 = vsub.s32 0, %v308
    %v310 = vrot.slane %v233, %v309
    %311 = vrot.lane.b32.xlu0 %v310, 64
    %v312 = vpop.permute.xlu0 %311
    %v314 = vadd.f32 %v294, %v312
    %316 = vrot.lane.b32.xlu0 %v314, 64
    %v317 = vpop.permute.xlu0 %316
    %v319 = vmul.f32 %v305, %v317
    %321 = vrot.lane.b32.xlu0 %v319, 64
    %v322 = vpop.permute.xlu0 %321
    %v324 = vadd.f32 %v217, %v322
    %v325 = vtanh.pop %v324
    %v326 = vsub.f32 1.0, %v305
    %328 = vrot.lane.b32.xlu0 %v325, 96
    %v329 = vpop.permute.xlu0 %328
    %v331 = vmul.f32 %v326, %v329
    %v332 = vmul.f32 %v305, 0.0
    %v333 = vadd.f32 %v331, %v332
    %v338 = vunpack.c.l.b16 %v229
    %v339 = vunpack.c.l.b16 %v230
    %v340 = vunpack.c.l.b16 %v231
    %v341 = vunpack.c.l.b16 %v232
    %v342 = vpack.c.b16 %v339, %v338
    %v343 = vpack.c.b16 %v341, %v340
    %346 = vmatprep.subr.bf16.mxu0 0
    %347 = vmatpush1.bf16.msra.mxu0 %v342
    %348 = vmatprep.subr.bf16.mxu0 0
    %349 = vmatpush1.bf16.msra.mxu0 %v343
    %350 = vmatprep.subr.bf16.mxu0 0
    %351 = vmatpush1.bf16.msra.mxu0 0
    %352 = vmatprep.subr.bf16.mxu0 0
    %353 = vmatpush1.bf16.msra.mxu0 0
    %354 = vmatprep.subr.bf16.mxu0 0
    %355 = vmatpush1.bf16.msra.mxu0 0
    %356 = vmatprep.subr.bf16.mxu0 0
    %357 = vmatpush1.bf16.msra.mxu0 0
    %358 = vmatprep.subr.bf16.mxu0 0
    %359 = vmatpush1.bf16.msra.mxu0 0
    %360 = vmatprep.subr.bf16.mxu0 0
    %361 = vmatpush1.bf16.msra.mxu0 0
    %362 = vmatprep.subr.bf16.mxu0 0
    %363 = vmatpush1.bf16.msra.mxu0 0
    %364 = vmatprep.subr.bf16.mxu0 0
    %365 = vmatpush1.bf16.msra.mxu0 0
    %366 = vmatprep.subr.bf16.mxu0 0
    %367 = vmatpush1.bf16.msra.mxu0 0
    %368 = vmatprep.subr.bf16.mxu0 0
    %369 = vmatpush1.bf16.msra.mxu0 0
    %370 = vmatprep.subr.bf16.mxu0 0
    %371 = vmatpush1.bf16.msra.mxu0 0
    %372 = vmatprep.subr.bf16.mxu0 0
    %373 = vmatpush1.bf16.msra.mxu0 0
    %374 = vmatprep.subr.bf16.mxu0 0
    %375 = vmatpush1.bf16.msra.mxu0 0
    %376 = vmatprep.subr.bf16.mxu0 0
    %377 = vmatpush1.bf16.msra.mxu0 0
    %378 = vmatprep.mubr.bf16.mxu0 0
    %379 = vmatmul.mubr.bf16.gmra.mrb[0].mxu0 %v257
    %v380 = vpop.f32.mrb[0].mxu0
    %v381 = vadd.f32 0.0, %v380
    %v382 = vpop.f32.mrb[0].mxu0
    %v383 = vpop.f32.mrb[0].mxu0
    %v384 = vpop.f32.mrb[0].mxu0
    %385 = vdwg.mxu0
    %v387 = vrot.slane %v381, 2
    %388 = vrot.lane.b32.xlu0 %v387, 96
    %v389 = vpop.permute.xlu0 %388
    %v391 = vadd.f32 %v221, %v389
    %v392 = vxor.u32 %v391, 2147483648
    %v393 = vmul.f32 %v392, 1.442695
    %v394 = vpow.pop %v393
    %v395 = vadd.f32 %v394, 1.0
    %v396 = vrcp.pop %v395
    %v397 = vmul.f32 1.0, %v396
    %v398 = vadd.f32 %v223, %v389
    %v399 = vxor.u32 %v398, 2147483648
    %v400 = vmul.f32 %v399, 1.442695
    %v401 = vpow.pop %v400
    %v402 = vadd.f32 %v401, 1.0
    %v403 = vrcp.pop %v402
    %v404 = vmul.f32 1.0, %v403
    %v406 = vlaneseq
    %v407 = vshrl.u32 %v406, 7
    %v408 = vsub.s32 0, %v407
    %v409 = vrot.slane %v234, %v408
    %410 = vrot.lane.b32.xlu0 %v409, 64
    %v411 = vpop.permute.xlu0 %410
    %v413 = vadd.f32 %v381, %v411
    %v415 = vrot.slane %v413, 2
    %416 = vrot.lane.b32.xlu0 %v415, 32
    %v417 = vpop.permute.xlu0 %416
    %v419 = vmul.f32 %v397, %v417
    %421 = vrot.lane.b32.xlu0 %v419, 64
    %v422 = vpop.permute.xlu0 %421
    %v424 = vadd.f32 %v223, %v422
    %v425 = vtanh.pop %v424
    %v426 = vsub.f32 1.0, %v404
    %428 = vrot.lane.b32.xlu0 %v425, 96
    %v429 = vpop.permute.xlu0 %428
    %v431 = vmul.f32 %v426, %v429
    %v432 = vmul.f32 %v404, 0.0
    %v433 = vadd.f32 %v431, %v432
    %v434 = vsel %vm236, 1, 0
    %435 = vset.pattern.permute.xlu0 0
    %436 = vperm.xlu0 %435, %v434
    %v437 = vpop.permute.xlu0 %436
    %vm438 = vcmp.eq.s32.totalorder %v437, 1
    %v439 = vsel %vm438, %v333, 0.0
    %441 = vrot.lane.b32.xlu0 %v439, 96
    %v442 = vpop.permute.xlu0 %441
    %vm444 = vcmask 254976
    %445 = vst.msk [vmem:[#allocation14] sm:$0x3] %vm444, %v442
    %v446 = vsel %vm243, 1, 0
    %447 = vset.pattern.permute.xlu0 0
    %448 = vperm.xlu0 %447, %v446
    %v449 = vpop.permute.xlu0 %448
    %vm450 = vcmp.eq.s32.totalorder %v449, 1
    %v452 = vrot.slane %v433, 6
    %v454 = vsel %vm450, %v452, 0.0
    %455 = vst.msk [vmem:[#allocation15 + $0xe] sm:$0x3] %vm444, %v454
    %v456 = vpack.c.bf16 %v439, %v439
    %458 = vrot.lane.b32.xlu0 %v456, 96
    %v459 = vpop.permute.xlu0 %458
    %v461 = vsel %vm178, %v459, 0
    %463 = vmatprep.subr.bf16.mxu0 0
    %464 = vmatpush1.bf16.msra.mxu0 %v252
    %465 = vmatprep.subr.bf16.mxu0 0
    %466 = vmatpush1.bf16.msra.mxu0 %v253
    %467 = vmatprep.subr.bf16.mxu0 0
    %468 = vmatpush1.bf16.msra.mxu0 0
    %469 = vmatprep.subr.bf16.mxu0 0
    %470 = vmatpush1.bf16.msra.mxu0 0
    %471 = vmatprep.subr.bf16.mxu0 0
    %472 = vmatpush1.bf16.msra.mxu0 0
    %473 = vmatprep.subr.bf16.mxu0 0
    %474 = vmatpush1.bf16.msra.mxu0 0
    %475 = vmatprep.subr.bf16.mxu0 0
    %476 = vmatpush1.bf16.msra.mxu0 0
    %477 = vmatprep.subr.bf16.mxu0 0
    %478 = vmatpush1.bf16.msra.mxu0 0
    %479 = vmatprep.subr.bf16.mxu0 0
    %480 = vmatpush1.bf16.msra.mxu0 0
    %481 = vmatprep.subr.bf16.mxu0 0
    %482 = vmatpush1.bf16.msra.mxu0 0
    %483 = vmatprep.subr.bf16.mxu0 0
    %484 = vmatpush1.bf16.msra.mxu0 0
    %485 = vmatprep.subr.bf16.mxu0 0
    %486 = vmatpush1.bf16.msra.mxu0 0
    %487 = vmatprep.subr.bf16.mxu0 0
    %488 = vmatpush1.bf16.msra.mxu0 0
    %489 = vmatprep.subr.bf16.mxu0 0
    %490 = vmatpush1.bf16.msra.mxu0 0
    %491 = vmatprep.subr.bf16.mxu0 0
    %492 = vmatpush1.bf16.msra.mxu0 0
    %493 = vmatprep.subr.bf16.mxu0 0
    %494 = vmatpush1.bf16.msra.mxu0 0
    %495 = vmatprep.mubr.bf16.mxu0 0
    %496 = vmatmul.mubr.bf16.gmra.mrb[0].mxu0 %v461
    %v497 = vpop.f32.mrb[0].mxu0
    %v498 = vadd.f32 0.0, %v497
    %v499 = vpop.f32.mrb[0].mxu0
    %v500 = vpop.f32.mrb[0].mxu0
    %v501 = vpop.f32.mrb[0].mxu0
    %502 = vdwg.mxu0
    %v504 = vrot.slane %v498, 6
    %v506 = vadd.f32 %v217, %v504
    %v507 = vxor.u32 %v506, 2147483648
    %v508 = vmul.f32 %v507, 1.442695
    %v509 = vpow.pop %v508
    %v510 = vadd.f32 %v509, 1.0
    %v511 = vrcp.pop %v510
    %v512 = vmul.f32 1.0, %v511
    %v513 = vadd.f32 %v498, %v312
    %v515 = vrot.slane %v513, 6
    %516 = vrot.lane.b32.xlu0 %v515, 64
    %v517 = vpop.permute.xlu0 %516
    %v519 = vmul.f32 %v512, %v517
    %521 = vrot.lane.b32.xlu0 %v519, 64
    %v522 = vpop.permute.xlu0 %521
    %v524 = vadd.f32 %v217, %v522
    %v525 = vtanh.pop %v524
    %v526 = vsub.f32 1.0, %v512
    %528 = vrot.lane.b32.xlu0 %v525, 96
    %v529 = vpop.permute.xlu0 %528
    %v531 = vmul.f32 %v526, %v529
    %v532 = vrot.slane %v439, 6
    %v534 = vmul.f32 %v512, %v532
    %v535 = vadd.f32 %v531, %v534
    %v536 = vpack.c.bf16 %v454, %v454
    %v538 = vsel %vm178, %v536, 0
    %540 = vmatprep.subr.bf16.mxu0 0
    %541 = vmatpush1.bf16.msra.mxu0 %v342
    %542 = vmatprep.subr.bf16.mxu0 0
    %543 = vmatpush1.bf16.msra.mxu0 %v343
    %544 = vmatprep.subr.bf16.mxu0 0
    %545 = vmatpush1.bf16.msra.mxu0 0
    %546 = vmatprep.subr.bf16.mxu0 0
    %547 = vmatpush1.bf16.msra.mxu0 0
    %548 = vmatprep.subr.bf16.mxu0 0
    %549 = vmatpush1.bf16.msra.mxu0 0
    %550 = vmatprep.subr.bf16.mxu0 0
    %551 = vmatpush1.bf16.msra.mxu0 0
    %552 = vmatprep.subr.bf16.mxu0 0
    %553 = vmatpush1.bf16.msra.mxu0 0
    %554 = vmatprep.subr.bf16.mxu0 0
    %555 = vmatpush1.bf16.msra.mxu0 0
    %556 = vmatprep.subr.bf16.mxu0 0
    %557 = vmatpush1.bf16.msra.mxu0 0
    %558 = vmatprep.subr.bf16.mxu0 0
    %559 = vmatpush1.bf16.msra.mxu0 0
    %560 = vmatprep.subr.bf16.mxu0 0
    %561 = vmatpush1.bf16.msra.mxu0 0
    %562 = vmatprep.subr.bf16.mxu0 0
    %563 = vmatpush1.bf16.msra.mxu0 0
    %564 = vmatprep.subr.bf16.mxu0 0
    %565 = vmatpush1.bf16.msra.mxu0 0
    %566 = vmatprep.subr.bf16.mxu0 0
    %567 = vmatpush1.bf16.msra.mxu0 0
    %568 = vmatprep.subr.bf16.mxu0 0
    %569 = vmatpush1.bf16.msra.mxu0 0
    %570 = vmatprep.subr.bf16.mxu0 0
    %571 = vmatpush1.bf16.msra.mxu0 0
    %572 = vmatprep.mubr.bf16.mxu0 0
    %573 = vmatmul.mubr.bf16.gmra.mrb[0].mxu0 %v538
    %v574 = vpop.f32.mrb[0].mxu0
    %v575 = vadd.f32 0.0, %v574
    %v576 = vpop.f32.mrb[0].mxu0
    %v577 = vpop.f32.mrb[0].mxu0
    %v578 = vpop.f32.mrb[0].mxu0
    %579 = vdwg.mxu0
    %v581 = vrot.slane %v575, 4
    %582 = vrot.lane.b32.xlu0 %v581, 96
    %v583 = vpop.permute.xlu0 %582
    %v585 = vadd.f32 %v221, %v583
    %v586 = vxor.u32 %v585, 2147483648
    %v587 = vmul.f32 %v586, 1.442695
    %v588 = vpow.pop %v587
    %v589 = vadd.f32 %v588, 1.0
    %v590 = vrcp.pop %v589
    %v591 = vmul.f32 1.0, %v590
    %v592 = vadd.f32 %v223, %v583
    %v593 = vxor.u32 %v592, 2147483648
    %v594 = vmul.f32 %v593, 1.442695
    %v595 = vpow.pop %v594
    %v596 = vadd.f32 %v595, 1.0
    %v597 = vrcp.pop %v596
    %v598 = vmul.f32 1.0, %v597
    %v599 = vadd.f32 %v575, %v411
    %v601 = vrot.slane %v599, 4
    %602 = vrot.lane.b32.xlu0 %v601, 32
    %v603 = vpop.permute.xlu0 %602
    %v605 = vmul.f32 %v591, %v603
    %607 = vrot.lane.b32.xlu0 %v605, 64
    %v608 = vpop.permute.xlu0 %607
    %v610 = vadd.f32 %v223, %v608
    %v611 = vtanh.pop %v610
    %v612 = vsub.f32 1.0, %v598
    %614 = vrot.lane.b32.xlu0 %v611, 96
    %v615 = vpop.permute.xlu0 %614
    %v617 = vmul.f32 %v612, %v615
    %v619 = vrot.slane %v454, 4
    %v621 = vmul.f32 %v598, %v619
    %v622 = vadd.f32 %v617, %v621
    %v623 = vsel %vm237, 1, 0
    %624 = vset.pattern.permute.xlu0 0
    %625 = vperm.xlu0 %624, %v623
    %v626 = vpop.permute.xlu0 %625
    %vm627 = vcmp.eq.s32.totalorder %v626, 1
    %v629 = vrot.slane %v535, 2
    %630 = vrot.lane.b32.xlu0 %v629, 96
    %v631 = vpop.permute.xlu0 %630
    %v633 = vsel %vm627, %v631, 0.0
    %634 = vst.msk [vmem:[#allocation14 + $0x2] sm:$0x3] %vm444, %v633
    %v635 = vsel %vm242, 1, 0
    %636 = vset.pattern.permute.xlu0 0
    %637 = vperm.xlu0 %636, %v635
    %v638 = vpop.permute.xlu0 %637
    %vm639 = vcmp.eq.s32.totalorder %v638, 1
    %v641 = vrot.slane %v622, 4
    %v643 = vsel %vm639, %v641, 0.0
    %644 = vst.msk [vmem:[#allocation15 + $0xc] sm:$0x3] %vm444, %v643
    %v645 = vsel %vm627, %v631, %v442
    %v646 = vsel %vm639, %v641, %v454
    %v647 = vpack.c.bf16 %v645, %v645
    %v649 = vsel %vm178, %v647, 0
    %651 = vmatprep.subr.bf16.mxu0 0
    %652 = vmatpush1.bf16.msra.mxu0 %v252
    %653 = vmatprep.subr.bf16.mxu0 0
    %654 = vmatpush1.bf16.msra.mxu0 %v253
    %655 = vmatprep.subr.bf16.mxu0 0
    %656 = vmatpush1.bf16.msra.mxu0 0
    %657 = vmatprep.subr.bf16.mxu0 0
    %658 = vmatpush1.bf16.msra.mxu0 0
    %659 = vmatprep.subr.bf16.mxu0 0
    %660 = vmatpush1.bf16.msra.mxu0 0
    %661 = vmatprep.subr.bf16.mxu0 0
    %662 = vmatpush1.bf16.msra.mxu0 0
    %663 = vmatprep.subr.bf16.mxu0 0
    %664 = vmatpush1.bf16.msra.mxu0 0
    %665 = vmatprep.subr.bf16.mxu0 0
    %666 = vmatpush1.bf16.msra.mxu0 0
    %667 = vmatprep.subr.bf16.mxu0 0
    %668 = vmatpush1.bf16.msra.mxu0 0
    %669 = vmatprep.subr.bf16.mxu0 0
    %670 = vmatpush1.bf16.msra.mxu0 0
    %671 = vmatprep.subr.bf16.mxu0 0
    %672 = vmatpush1.bf16.msra.mxu0 0
    %673 = vmatprep.subr.bf16.mxu0 0
    %674 = vmatpush1.bf16.msra.mxu0 0
    %675 = vmatprep.subr.bf16.mxu0 0
    %676 = vmatpush1.bf16.msra.mxu0 0
    %677 = vmatprep.subr.bf16.mxu0 0
    %678 = vmatpush1.bf16.msra.mxu0 0
    %679 = vmatprep.subr.bf16.mxu0 0
    %680 = vmatpush1.bf16.msra.mxu0 0
    %681 = vmatprep.subr.bf16.mxu0 0
    %682 = vmatpush1.bf16.msra.mxu0 0
    %683 = vmatprep.mubr.bf16.mxu0 0
    %684 = vmatmul.mubr.bf16.gmra.mrb[0].mxu0 %v649
    %v685 = vpop.f32.mrb[0].mxu0
    %v686 = vadd.f32 0.0, %v685
    %v687 = vpop.f32.mrb[0].mxu0
    %v688 = vpop.f32.mrb[0].mxu0
    %v689 = vpop.f32.mrb[0].mxu0
    %690 = vdwg.mxu0
    %v692 = vrot.slane %v686, 4
    %v694 = vadd.f32 %v217, %v692
    %v695 = vxor.u32 %v694, 2147483648
    %v696 = vmul.f32 %v695, 1.442695
    %v697 = vpow.pop %v696
    %v698 = vadd.f32 %v697, 1.0
    %v699 = vrcp.pop %v698
    %v700 = vmul.f32 1.0, %v699
    %v701 = vadd.f32 %v686, %v312
    %v703 = vrot.slane %v701, 4
    %704 = vrot.lane.b32.xlu0 %v703, 64
    %v705 = vpop.permute.xlu0 %704
    %v707 = vmul.f32 %v700, %v705
    %709 = vrot.lane.b32.xlu0 %v707, 64
    %v710 = vpop.permute.xlu0 %709
    %v712 = vadd.f32 %v217, %v710
    %v713 = vtanh.pop %v712
    %v714 = vsub.f32 1.0, %v700
    %716 = vrot.lane.b32.xlu0 %v713, 96
    %v717 = vpop.permute.xlu0 %716
    %v719 = vmul.f32 %v714, %v717
    %v721 = vrot.slane %v645, 4
    %722 = vrot.lane.b32.xlu0 %v721, 32
    %v723 = vpop.permute.xlu0 %722
    %v725 = vmul.f32 %v700, %v723
    %v726 = vadd.f32 %v719, %v725
    %v727 = vpack.c.bf16 %v646, %v646
    %v729 = vsel %vm178, %v727, 0
    %731 = vmatprep.subr.bf16.mxu0 0
    %732 = vmatpush1.bf16.msra.mxu0 %v342
    %733 = vmatprep.subr.bf16.mxu0 0
    %734 = vmatpush1.bf16.msra.mxu0 %v343
    %735 = vmatprep.subr.bf16.mxu0 0
    %736 = vmatpush1.bf16.msra.mxu0 0
    %737 = vmatprep.subr.bf16.mxu0 0
    %738 = vmatpush1.bf16.msra.mxu0 0
    %739 = vmatprep.subr.bf16.mxu0 0
    %740 = vmatpush1.bf16.msra.mxu0 0
    %741 = vmatprep.subr.bf16.mxu0 0
    %742 = vmatpush1.bf16.msra.mxu0 0
    %743 = vmatprep.subr.bf16.mxu0 0
    %744 = vmatpush1.bf16.msra.mxu0 0
    %745 = vmatprep.subr.bf16.mxu0 0
    %746 = vmatpush1.bf16.msra.mxu0 0
    %747 = vmatprep.subr.bf16.mxu0 0
    %748 = vmatpush1.bf16.msra.mxu0 0
    %749 = vmatprep.subr.bf16.mxu0 0
    %750 = vmatpush1.bf16.msra.mxu0 0
    %751 = vmatprep.subr.bf16.mxu0 0
    %752 = vmatpush1.bf16.msra.mxu0 0
    %753 = vmatprep.subr.bf16.mxu0 0
    %754 = vmatpush1.bf16.msra.mxu0 0
    %755 = vmatprep.subr.bf16.mxu0 0
    %756 = vmatpush1.bf16.msra.mxu0 0
    %757 = vmatprep.subr.bf16.mxu0 0
    %758 = vmatpush1.bf16.msra.mxu0 0
    %759 = vmatprep.subr.bf16.mxu0 0
    %760 = vmatpush1.bf16.msra.mxu0 0
    %761 = vmatprep.subr.bf16.mxu0 0
    %762 = vmatpush1.bf16.msra.mxu0 0
    %763 = vmatprep.mubr.bf16.mxu0 0
    %764 = vmatmul.mubr.bf16.gmra.mrb[0].mxu0 %v729
    %v765 = vpop.f32.mrb[0].mxu0
    %v766 = vadd.f32 0.0, %v765
    %v767 = vpop.f32.mrb[0].mxu0
    %v768 = vpop.f32.mrb[0].mxu0
    %v769 = vpop.f32.mrb[0].mxu0
    %770 = vdwg.mxu0
    %v772 = vrot.slane %v766, 6
    %773 = vrot.lane.b32.xlu0 %v772, 96
    %v774 = vpop.permute.xlu0 %773
    %v776 = vadd.f32 %v221, %v774
    %v777 = vxor.u32 %v776, 2147483648
    %v778 = vmul.f32 %v777, 1.442695
    %v779 = vpow.pop %v778
    %v780 = vadd.f32 %v779, 1.0
    %v781 = vrcp.pop %v780
    %v782 = vmul.f32 1.0, %v781
    %v783 = vadd.f32 %v223, %v774
    %v784 = vxor.u32 %v783, 2147483648
    %v785 = vmul.f32 %v784, 1.442695
    %v786 = vpow.pop %v785
    %v787 = vadd.f32 %v786, 1.0
    %v788 = vrcp.pop %v787
    %v789 = vmul.f32 1.0, %v788
    %v790 = vadd.f32 %v766, %v411
    %v792 = vrot.slane %v790, 6
    %793 = vrot.lane.b32.xlu0 %v792, 32
    %v794 = vpop.permute.xlu0 %793
    %v796 = vmul.f32 %v782, %v794
    %798 = vrot.lane.b32.xlu0 %v796, 64
    %v799 = vpop.permute.xlu0 %798
    %v801 = vadd.f32 %v223, %v799
    %v802 = vtanh.pop %v801
    %v803 = vsub.f32 1.0, %v789
    %805 = vrot.lane.b32.xlu0 %v802, 96
    %v806 = vpop.permute.xlu0 %805
    %v808 = vmul.f32 %v803, %v806
    %v810 = vrot.slane %v646, 6
    %v812 = vmul.f32 %v789, %v810
    %v813 = vadd.f32 %v808, %v812
    %v814 = vsel %vm238, 1, 0
    %815 = vset.pattern.permute.xlu0 0
    %816 = vperm.xlu0 %815, %v814
    %v817 = vpop.permute.xlu0 %816
    %vm818 = vcmp.eq.s32.totalorder %v817, 1
    %v820 = vrot.slane %v726, 4
    %821 = vrot.lane.b32.xlu0 %v820, 96
    %v822 = vpop.permute.xlu0 %821
    %v824 = vsel %vm818, %v822, 0.0
    %825 = vst.msk [vmem:[#allocation14 + $0x4] sm:$0x3] %vm444, %v824
    %v826 = vsel %vm241, 1, 0
    %827 = vset.pattern.permute.xlu0 0
    %828 = vperm.xlu0 %827, %v826
    %v829 = vpop.permute.xlu0 %828
    %vm830 = vcmp.eq.s32.totalorder %v829, 1
    %v832 = vrot.slane %v813, 2
    %v834 = vsel %vm830, %v832, 0.0
    %835 = vst.msk [vmem:[#allocation15 + $0xa] sm:$0x3] %vm444, %v834
    %v836 = vsel %vm818, %v822, %v645
    %v837 = vsel %vm830, %v832, %v646
    %v838 = vpack.c.bf16 %v836, %v836
    %v840 = vsel %vm178, %v838, 0
    %842 = vmatprep.subr.bf16.mxu0 0
    %843 = vmatpush1.bf16.msra.mxu0 %v252
    %844 = vmatprep.subr.bf16.mxu0 0
    %845 = vmatpush1.bf16.msra.mxu0 %v253
    %846 = vmatprep.subr.bf16.mxu0 0
    %847 = vmatpush1.bf16.msra.mxu0 0
    %848 = vmatprep.subr.bf16.mxu0 0
    %849 = vmatpush1.bf16.msra.mxu0 0
    %850 = vmatprep.subr.bf16.mxu0 0
    %851 = vmatpush1.bf16.msra.mxu0 0
    %852 = vmatprep.subr.bf16.mxu0 0
    %853 = vmatpush1.bf16.msra.mxu0 0
    %854 = vmatprep.subr.bf16.mxu0 0
    %855 = vmatpush1.bf16.msra.mxu0 0
    %856 = vmatprep.subr.bf16.mxu0 0
    %857 = vmatpush1.bf16.msra.mxu0 0
    %858 = vmatprep.subr.bf16.mxu0 0
    %859 = vmatpush1.bf16.msra.mxu0 0
    %860 = vmatprep.subr.bf16.mxu0 0
    %861 = vmatpush1.bf16.msra.mxu0 0
    %862 = vmatprep.subr.bf16.mxu0 0
    %863 = vmatpush1.bf16.msra.mxu0 0
    %864 = vmatprep.subr.bf16.mxu0 0
    %865 = vmatpush1.bf16.msra.mxu0 0
    %866 = vmatprep.subr.bf16.mxu0 0
    %867 = vmatpush1.bf16.msra.mxu0 0
    %868 = vmatprep.subr.bf16.mxu0 0
    %869 = vmatpush1.bf16.msra.mxu0 0
    %870 = vmatprep.subr.bf16.mxu0 0
    %871 = vmatpush1.bf16.msra.mxu0 0
    %872 = vmatprep.subr.bf16.mxu0 0
    %873 = vmatpush1.bf16.msra.mxu0 0
    %874 = vmatprep.mubr.bf16.mxu0 0
    %875 = vmatmul.mubr.bf16.gmra.mrb[0].mxu0 %v840
    %v876 = vpop.f32.mrb[0].mxu0
    %v877 = vadd.f32 0.0, %v876
    %v878 = vpop.f32.mrb[0].mxu0
    %v879 = vpop.f32.mrb[0].mxu0
    %v880 = vpop.f32.mrb[0].mxu0
    %881 = vdwg.mxu0
    %v883 = vrot.slane %v877, 2
    %v885 = vadd.f32 %v217, %v883
    %v886 = vxor.u32 %v885, 2147483648
    %v887 = vmul.f32 %v886, 1.442695
    %v888 = vpow.pop %v887
    %v889 = vadd.f32 %v888, 1.0
    %v890 = vrcp.pop %v889
    %v891 = vmul.f32 1.0, %v890
    %v892 = vadd.f32 %v877, %v312
    %v894 = vrot.slane %v892, 2
    %895 = vrot.lane.b32.xlu0 %v894, 64
    %v896 = vpop.permute.xlu0 %895
    %v898 = vmul.f32 %v891, %v896
    %900 = vrot.lane.b32.xlu0 %v898, 64
    %v901 = vpop.permute.xlu0 %900
    %v903 = vadd.f32 %v217, %v901
    %v904 = vtanh.pop %v903
    %v905 = vsub.f32 1.0, %v891
    %907 = vrot.lane.b32.xlu0 %v904, 96
    %v908 = vpop.permute.xlu0 %907
    %v910 = vmul.f32 %v905, %v908
    %v912 = vrot.slane %v836, 2
    %913 = vrot.lane.b32.xlu0 %v912, 32
    %v914 = vpop.permute.xlu0 %913
    %v916 = vmul.f32 %v891, %v914
    %v917 = vadd.f32 %v910, %v916
    %v918 = vpack.c.bf16 %v837, %v837
    %v920 = vsel %vm178, %v918, 0
    %922 = vmatprep.subr.bf16.mxu0 0
    %923 = vmatpush1.bf16.msra.mxu0 %v342
    %924 = vmatprep.subr.bf16.mxu0 0
    %925 = vmatpush1.bf16.msra.mxu0 %v343
    %926 = vmatprep.subr.bf16.mxu0 0
    %927 = vmatpush1.bf16.msra.mxu0 0
    %928 = vmatprep.subr.bf16.mxu0 0
    %929 = vmatpush1.bf16.msra.mxu0 0
    %930 = vmatprep.subr.bf16.mxu0 0
    %931 = vmatpush1.bf16.msra.mxu0 0
    %932 = vmatprep.subr.bf16.mxu0 0
    %933 = vmatpush1.bf16.msra.mxu0 0
    %934 = vmatprep.subr.bf16.mxu0 0
    %935 = vmatpush1.bf16.msra.mxu0 0
    %936 = vmatprep.subr.bf16.mxu0 0
    %937 = vmatpush1.bf16.msra.mxu0 0
    %938 = vmatprep.subr.bf16.mxu0 0
    %939 = vmatpush1.bf16.msra.mxu0 0
    %940 = vmatprep.subr.bf16.mxu0 0
    %941 = vmatpush1.bf16.msra.mxu0 0
    %942 = vmatprep.subr.bf16.mxu0 0
    %943 = vmatpush1.bf16.msra.mxu0 0
    %944 = vmatprep.subr.bf16.mxu0 0
    %945 = vmatpush1.bf16.msra.mxu0 0
    %946 = vmatprep.subr.bf16.mxu0 0
    %947 = vmatpush1.bf16.msra.mxu0 0
    %948 = vmatprep.subr.bf16.mxu0 0
    %949 = vmatpush1.bf16.msra.mxu0 0
    %950 = vmatprep.subr.bf16.mxu0 0
    %951 = vmatpush1.bf16.msra.mxu0 0
    %952 = vmatprep.subr.bf16.mxu0 0
    %953 = vmatpush1.bf16.msra.mxu0 0
    %954 = vmatprep.mubr.bf16.mxu0 0
    %955 = vmatmul.mubr.bf16.gmra.mrb[0].mxu0 %v920
    %v956 = vpop.f32.mrb[0].mxu0
    %v957 = vadd.f32 0.0, %v956
    %v958 = vpop.f32.mrb[0].mxu0
    %v959 = vpop.f32.mrb[0].mxu0
    %v960 = vpop.f32.mrb[0].mxu0
    %961 = vdwg.mxu0
    %963 = vrot.lane.b32.xlu0 %v957, 96
    %v964 = vpop.permute.xlu0 %963
    %v966 = vadd.f32 %v221, %v964
    %v967 = vxor.u32 %v966, 2147483648
    %v968 = vmul.f32 %v967, 1.442695
    %v969 = vpow.pop %v968
    %v970 = vadd.f32 %v969, 1.0
    %v971 = vrcp.pop %v970
    %v972 = vmul.f32 1.0, %v971
    %v973 = vadd.f32 %v223, %v964
    %v974 = vxor.u32 %v973, 2147483648
    %v975 = vmul.f32 %v974, 1.442695
    %v976 = vpow.pop %v975
    %v977 = vadd.f32 %v976, 1.0
    %v978 = vrcp.pop %v977
    %v979 = vmul.f32 1.0, %v978
    %v980 = vadd.f32 %v957, %v411
    %982 = vrot.lane.b32.xlu0 %v980, 32
    %v983 = vpop.permute.xlu0 %982
    %v985 = vmul.f32 %v972, %v983
    %987 = vrot.lane.b32.xlu0 %v985, 64
    %v988 = vpop.permute.xlu0 %987
    %v990 = vadd.f32 %v223, %v988
    %v991 = vtanh.pop %v990
    %v992 = vsub.f32 1.0, %v979
    %994 = vrot.lane.b32.xlu0 %v991, 96
    %v995 = vpop.permute.xlu0 %994
    %v997 = vmul.f32 %v992, %v995
    %v998 = vmul.f32 %v979, %v837
    %v999 = vadd.f32 %v997, %v998
    %v1000 = vsel %vm239, 1, 0
    %1001 = vset.pattern.permute.xlu0 0
    %1002 = vperm.xlu0 %1001, %v1000
    %v1003 = vpop.permute.xlu0 %1002
    %vm1004 = vcmp.eq.s32.totalorder %v1003, 1
    %v1006 = vrot.slane %v917, 6
    %1007 = vrot.lane.b32.xlu0 %v1006, 96
    %v1008 = vpop.permute.xlu0 %1007
    %v1010 = vsel %vm1004, %v1008, 0.0
    %1011 = vst.msk [vmem:[#allocation14 + $0x6] sm:$0x3] %vm444, %v1010
    %v1012 = vsel %vm240, 1, 0
    %1013 = vset.pattern.permute.xlu0 0
    %1014 = vperm.xlu0 %1013, %v1012
    %v1015 = vpop.permute.xlu0 %1014
    %vm1016 = vcmp.eq.s32.totalorder %v1015, 1
    %v1017 = vsel %vm1016, %v999, 0.0
    %1018 = vst.msk [vmem:[#allocation15 + $0x8] sm:$0x3] %vm444, %v1017
    %v1019 = vsel %vm1004, %v1008, %v836
    %v1020 = vsel %vm1016, %v999, %v837
    %v1021 = vpack.c.bf16 %v1019, %v1019
    %v1023 = vsel %vm178, %v1021, 0
    %1025 = vmatprep.subr.bf16.mxu0 0
    %1026 = vmatpush1.bf16.msra.mxu0 %v252
    %1027 = vmatprep.subr.bf16.mxu0 0
    %1028 = vmatpush1.bf16.msra.mxu0 %v253
    %1029 = vmatprep.subr.bf16.mxu0 0
    %1030 = vmatpush1.bf16.msra.mxu0 0
    %1031 = vmatprep.subr.bf16.mxu0 0
    %1032 = vmatpush1.bf16.msra.mxu0 0
    %1033 = vmatprep.subr.bf16.mxu0 0
    %1034 = vmatpush1.bf16.msra.mxu0 0
    %1035 = vmatprep.subr.bf16.mxu0 0
    %1036 = vmatpush1.bf16.msra.mxu0 0
    %1037 = vmatprep.subr.bf16.mxu0 0
    %1038 = vmatpush1.bf16.msra.mxu0 0
    %1039 = vmatprep.subr.bf16.mxu0 0
    %1040 = vmatpush1.bf16.msra.mxu0 0
    %1041 = vmatprep.subr.bf16.mxu0 0
    %1042 = vmatpush1.bf16.msra.mxu0 0
    %1043 = vmatprep.subr.bf16.mxu0 0
    %1044 = vmatpush1.bf16.msra.mxu0 0
    %1045 = vmatprep.subr.bf16.mxu0 0
    %1046 = vmatpush1.bf16.msra.mxu0 0
    %1047 = vmatprep.subr.bf16.mxu0 0
    %1048 = vmatpush1.bf16.msra.mxu0 0
    %1049 = vmatprep.subr.bf16.mxu0 0
    %1050 = vmatpush1.bf16.msra.mxu0 0
    %1051 = vmatprep.subr.bf16.mxu0 0
    %1052 = vmatpush1.bf16.msra.mxu0 0
    %1053 = vmatprep.subr.bf16.mxu0 0
    %1054 = vmatpush1.bf16.msra.mxu0 0
    %1055 = vmatprep.subr.bf16.mxu0 0
    %1056 = vmatpush1.bf16.msra.mxu0 0
    %1057 = vmatprep.mubr.bf16.mxu0 0
    %1058 = vmatmul.mubr.bf16.gmra.mrb[0].mxu0 %v1023
    %v1059 = vpop.f32.mrb[0].mxu0
    %v1060 = vadd.f32 0.0, %v1059
    %v1061 = vpop.f32.mrb[0].mxu0
    %v1062 = vpop.f32.mrb[0].mxu0
    %v1063 = vpop.f32.mrb[0].mxu0
    %1064 = vdwg.mxu0
    %v1065 = vadd.f32 %v221, %v1060
    %v1066 = vxor.u32 %v1065, 2147483648
    %v1067 = vmul.f32 %v1066, 1.442695
    %v1068 = vpow.pop %v1067
    %v1069 = vadd.f32 %v1068, 1.0
    %v1070 = vrcp.pop %v1069
    %v1071 = vmul.f32 1.0, %v1070
    %v1072 = vadd.f32 %v1060, %v312
    %1074 = vrot.lane.b32.xlu0 %v1072, 64
    %v1075 = vpop.permute.xlu0 %1074
    %v1077 = vmul.f32 %v1071, %v1075
    %1079 = vrot.lane.b32.xlu0 %v1077, 64
    %v1080 = vpop.permute.xlu0 %1079
    %v1082 = vadd.f32 %v221, %v1080
    %v1083 = vtanh.pop %v1082
    %v1084 = vsub.f32 1.0, %v1071
    %1086 = vrot.lane.b32.xlu0 %v1083, 96
    %v1087 = vpop.permute.xlu0 %1086
    %v1089 = vmul.f32 %v1084, %v1087
    %1091 = vrot.lane.b32.xlu0 %v1019, 32
    %v1092 = vpop.permute.xlu0 %1091
    %v1094 = vmul.f32 %v1071, %v1092
    %v1095 = vadd.f32 %v1089, %v1094
    %v1096 = vpack.c.bf16 %v1020, %v1020
    %v1098 = vsel %vm178, %v1096, 0
    %1100 = vmatprep.subr.bf16.mxu0 0
    %1101 = vmatpush1.bf16.msra.mxu0 %v342
    %1102 = vmatprep.subr.bf16.mxu0 0
    %1103 = vmatpush1.bf16.msra.mxu0 %v343
    %1104 = vmatprep.subr.bf16.mxu0 0
    %1105 = vmatpush1.bf16.msra.mxu0 0
    %1106 = vmatprep.subr.bf16.mxu0 0
    %1107 = vmatpush1.bf16.msra.mxu0 0
    %1108 = vmatprep.subr.bf16.mxu0 0
    %1109 = vmatpush1.bf16.msra.mxu0 0
    %1110 = vmatprep.subr.bf16.mxu0 0
    %1111 = vmatpush1.bf16.msra.mxu0 0
    %1112 = vmatprep.subr.bf16.mxu0 0
    %1113 = vmatpush1.bf16.msra.mxu0 0
    %1114 = vmatprep.subr.bf16.mxu0 0
    %1115 = vmatpush1.bf16.msra.mxu0 0
    %1116 = vmatprep.subr.bf16.mxu0 0
    %1117 = vmatpush1.bf16.msra.mxu0 0
    %1118 = vmatprep.subr.bf16.mxu0 0
    %1119 = vmatpush1.bf16.msra.mxu0 0
    %1120 = vmatprep.subr.bf16.mxu0 0
    %1121 = vmatpush1.bf16.msra.mxu0 0
    %1122 = vmatprep.subr.bf16.mxu0 0
    %1123 = vmatpush1.bf16.msra.mxu0 0
    %1124 = vmatprep.subr.bf16.mxu0 0
    %1125 = vmatpush1.bf16.msra.mxu0 0
    %1126 = vmatprep.subr.bf16.mxu0 0
    %1127 = vmatpush1.bf16.msra.mxu0 0
    %1128 = vmatprep.subr.bf16.mxu0 0
    %1129 = vmatpush1.bf16.msra.mxu0 0
    %1130 = vmatprep.subr.bf16.mxu0 0
    %1131 = vmatpush1.bf16.msra.mxu0 0
    %1132 = vmatprep.mubr.bf16.mxu0 0
    %1133 = vmatmul.mubr.bf16.gmra.mrb[0].mxu0 %v1098
    %v1134 = vpop.f32.mrb[0].mxu0
    %v1135 = vadd.f32 0.0, %v1134
    %v1136 = vpop.f32.mrb[0].mxu0
    %v1137 = vpop.f32.mrb[0].mxu0
    %v1138 = vpop.f32.mrb[0].mxu0
    %1139 = vdwg.mxu0
    %v1141 = vrot.slane %v1135, 2
    %1142 = vrot.lane.b32.xlu0 %v1141, 96
    %v1143 = vpop.permute.xlu0 %1142
    %v1145 = vadd.f32 %v217, %v1143
    %v1146 = vxor.u32 %v1145, 2147483648
    %v1147 = vmul.f32 %v1146, 1.442695
    %v1148 = vpow.pop %v1147
    %v1149 = vadd.f32 %v1148, 1.0
    %v1150 = vrcp.pop %v1149
    %v1151 = vmul.f32 1.0, %v1150
    %v1152 = vadd.f32 %v219, %v1143
    %v1153 = vxor.u32 %v1152, 2147483648
    %v1154 = vmul.f32 %v1153, 1.442695
    %v1155 = vpow.pop %v1154
    %v1156 = vadd.f32 %v1155, 1.0
    %v1157 = vrcp.pop %v1156
    %v1158 = vmul.f32 1.0, %v1157
    %v1159 = vadd.f32 %v1135, %v411
    %v1161 = vrot.slane %v1159, 2
    %1162 = vrot.lane.b32.xlu0 %v1161, 32
    %v1163 = vpop.permute.xlu0 %1162
    %v1165 = vmul.f32 %v1151, %v1163
    %1167 = vrot.lane.b32.xlu0 %v1165, 64
    %v1168 = vpop.permute.xlu0 %1167
    %v1170 = vadd.f32 %v219, %v1168
    %v1171 = vtanh.pop %v1170
    %v1172 = vsub.f32 1.0, %v1158
    %1174 = vrot.lane.b32.xlu0 %v1171, 96
    %v1175 = vpop.permute.xlu0 %1174
    %v1177 = vmul.f32 %v1172, %v1175
    %v1179 = vrot.slane %v1020, 2
    %v1181 = vmul.f32 %v1158, %v1179
    %v1182 = vadd.f32 %v1177, %v1181
    %v1183 = vsel %vm1016, %v1095, 0.0
    %1185 = vrot.lane.b32.xlu0 %v1183, 96
    %v1186 = vpop.permute.xlu0 %1185
    %1188 = vst.msk [vmem:[#allocation14 + $0x8] sm:$0x3] %vm444, %v1186
    %v1190 = vrot.slane %v1182, 6
    %v1192 = vsel %vm1004, %v1190, 0.0
    %1193 = vst.msk [vmem:[#allocation15 + $0x6] sm:$0x3] %vm444, %v1192
    %v1194 = vsel %vm1016, %v1095, %v1092
    %v1195 = vsel %vm1004, %v1190, %v1020
    %v1196 = vpack.c.bf16 %v1194, %v1194
    %1198 = vrot.lane.b32.xlu0 %v1196, 96
    %v1199 = vpop.permute.xlu0 %1198
    %v1201 = vsel %vm178, %v1199, 0
    %1203 = vmatprep.subr.bf16.mxu0 0
    %1204 = vmatpush1.bf16.msra.mxu0 %v252
    %1205 = vmatprep.subr.bf16.mxu0 0
    %1206 = vmatpush1.bf16.msra.mxu0 %v253
    %1207 = vmatprep.subr.bf16.mxu0 0
    %1208 = vmatpush1.bf16.msra.mxu0 0
    %1209 = vmatprep.subr.bf16.mxu0 0
    %1210 = vmatpush1.bf16.msra.mxu0 0
    %1211 = vmatprep.subr.bf16.mxu0 0
    %1212 = vmatpush1.bf16.msra.mxu0 0
    %1213 = vmatprep.subr.bf16.mxu0 0
    %1214 = vmatpush1.bf16.msra.mxu0 0
    %1215 = vmatprep.subr.bf16.mxu0 0
    %1216 = vmatpush1.bf16.msra.mxu0 0
    %1217 = vmatprep.subr.bf16.mxu0 0
    %1218 = vmatpush1.bf16.msra.mxu0 0
    %1219 = vmatprep.subr.bf16.mxu0 0
    %1220 = vmatpush1.bf16.msra.mxu0 0
    %1221 = vmatprep.subr.bf16.mxu0 0
    %1222 = vmatpush1.bf16.msra.mxu0 0
    %1223 = vmatprep.subr.bf16.mxu0 0
    %1224 = vmatpush1.bf16.msra.mxu0 0
    %1225 = vmatprep.subr.bf16.mxu0 0
    %1226 = vmatpush1.bf16.msra.mxu0 0
    %1227 = vmatprep.subr.bf16.mxu0 0
    %1228 = vmatpush1.bf16.msra.mxu0 0
    %1229 = vmatprep.subr.bf16.mxu0 0
    %1230 = vmatpush1.bf16.msra.mxu0 0
    %1231 = vmatprep.subr.bf16.mxu0 0
    %1232 = vmatpush1.bf16.msra.mxu0 0
    %1233 = vmatprep.subr.bf16.mxu0 0
    %1234 = vmatpush1.bf16.msra.mxu0 0
    %1235 = vmatprep.mubr.bf16.mxu0 0
    %1236 = vmatmul.mubr.bf16.gmra.mrb[0].mxu0 %v1201
    %v1237 = vpop.f32.mrb[0].mxu0
    %v1238 = vadd.f32 0.0, %v1237
    %v1239 = vpop.f32.mrb[0].mxu0
    %v1240 = vpop.f32.mrb[0].mxu0
    %v1241 = vpop.f32.mrb[0].mxu0
    %1242 = vdwg.mxu0
    %v1244 = vrot.slane %v1238, 6
    %v1246 = vadd.f32 %v221, %v1244
    %v1247 = vxor.u32 %v1246, 2147483648
    %v1248 = vmul.f32 %v1247, 1.442695
    %v1249 = vpow.pop %v1248
    %v1250 = vadd.f32 %v1249, 1.0
    %v1251 = vrcp.pop %v1250
    %v1252 = vmul.f32 1.0, %v1251
    %v1253 = vadd.f32 %v1238, %v312
    %v1255 = vrot.slane %v1253, 6
    %1256 = vrot.lane.b32.xlu0 %v1255, 64
    %v1257 = vpop.permute.xlu0 %1256
    %v1259 = vmul.f32 %v1252, %v1257
    %1261 = vrot.lane.b32.xlu0 %v1259, 64
    %v1262 = vpop.permute.xlu0 %1261
    %v1264 = vadd.f32 %v221, %v1262
    %v1265 = vtanh.pop %v1264
    %v1266 = vsub.f32 1.0, %v1252
    %1268 = vrot.lane.b32.xlu0 %v1265, 96
    %v1269 = vpop.permute.xlu0 %1268
    %v1271 = vmul.f32 %v1266, %v1269
    %v1273 = vrot.slane %v1194, 6
    %v1275 = vmul.f32 %v1252, %v1273
    %v1276 = vadd.f32 %v1271, %v1275
    %v1277 = vpack.c.bf16 %v1195, %v1195
    %v1279 = vsel %vm178, %v1277, 0
    %1281 = vmatprep.subr.bf16.mxu0 0
    %1282 = vmatpush1.bf16.msra.mxu0 %v342
    %1283 = vmatprep.subr.bf16.mxu0 0
    %1284 = vmatpush1.bf16.msra.mxu0 %v343
    %1285 = vmatprep.subr.bf16.mxu0 0
    %1286 = vmatpush1.bf16.msra.mxu0 0
    %1287 = vmatprep.subr.bf16.mxu0 0
    %1288 = vmatpush1.bf16.msra.mxu0 0
    %1289 = vmatprep.subr.bf16.mxu0 0
    %1290 = vmatpush1.bf16.msra.mxu0 0
    %1291 = vmatprep.subr.bf16.mxu0 0
    %1292 = vmatpush1.bf16.msra.mxu0 0
    %1293 = vmatprep.subr.bf16.mxu0 0
    %1294 = vmatpush1.bf16.msra.mxu0 0
    %1295 = vmatprep.subr.bf16.mxu0 0
    %1296 = vmatpush1.bf16.msra.mxu0 0
    %1297 = vmatprep.subr.bf16.mxu0 0
    %1298 = vmatpush1.bf16.msra.mxu0 0
    %1299 = vmatprep.subr.bf16.mxu0 0
    %1300 = vmatpush1.bf16.msra.mxu0 0
    %1301 = vmatprep.subr.bf16.mxu0 0
    %1302 = vmatpush1.bf16.msra.mxu0 0
    %1303 = vmatprep.subr.bf16.mxu0 0
    %1304 = vmatpush1.bf16.msra.mxu0 0
    %1305 = vmatprep.subr.bf16.mxu0 0
    %1306 = vmatpush1.bf16.msra.mxu0 0
    %1307 = vmatprep.subr.bf16.mxu0 0
    %1308 = vmatpush1.bf16.msra.mxu0 0
    %1309 = vmatprep.subr.bf16.mxu0 0
    %1310 = vmatpush1.bf16.msra.mxu0 0
    %1311 = vmatprep.subr.bf16.mxu0 0
    %1312 = vmatpush1.bf16.msra.mxu0 0
    %1313 = vmatprep.mubr.bf16.mxu0 0
    %1314 = vmatmul.mubr.bf16.gmra.mrb[0].mxu0 %v1279
    %v1315 = vpop.f32.mrb[0].mxu0
    %v1316 = vadd.f32 0.0, %v1315
    %v1317 = vpop.f32.mrb[0].mxu0
    %v1318 = vpop.f32.mrb[0].mxu0
    %v1319 = vpop.f32.mrb[0].mxu0
    %1320 = vdwg.mxu0
    %v1322 = vrot.slane %v1316, 4
    %1323 = vrot.lane.b32.xlu0 %v1322, 96
    %v1324 = vpop.permute.xlu0 %1323
    %v1326 = vadd.f32 %v217, %v1324
    %v1327 = vxor.u32 %v1326, 2147483648
    %v1328 = vmul.f32 %v1327, 1.442695
    %v1329 = vpow.pop %v1328
    %v1330 = vadd.f32 %v1329, 1.0
    %v1331 = vrcp.pop %v1330
    %v1332 = vmul.f32 1.0, %v1331
    %v1333 = vadd.f32 %v219, %v1324
    %v1334 = vxor.u32 %v1333, 2147483648
    %v1335 = vmul.f32 %v1334, 1.442695
    %v1336 = vpow.pop %v1335
    %v1337 = vadd.f32 %v1336, 1.0
    %v1338 = vrcp.pop %v1337
    %v1339 = vmul.f32 1.0, %v1338
    %v1340 = vadd.f32 %v1316, %v411
    %v1342 = vrot.slane %v1340, 4
    %1343 = vrot.lane.b32.xlu0 %v1342, 32
    %v1344 = vpop.permute.xlu0 %1343
    %v1346 = vmul.f32 %v1332, %v1344
    %1348 = vrot.lane.b32.xlu0 %v1346, 64
    %v1349 = vpop.permute.xlu0 %1348
    %v1351 = vadd.f32 %v219, %v1349
    %v1352 = vtanh.pop %v1351
    %v1353 = vsub.f32 1.0, %v1339
    %1355 = vrot.lane.b32.xlu0 %v1352, 96
    %v1356 = vpop.permute.xlu0 %1355
    %v1358 = vmul.f32 %v1353, %v1356
    %v1360 = vrot.slane %v1195, 4
    %v1362 = vmul.f32 %v1339, %v1360
    %v1363 = vadd.f32 %v1358, %v1362
    %v1365 = vrot.slane %v1276, 2
    %1366 = vrot.lane.b32.xlu0 %v1365, 96
    %v1367 = vpop.permute.xlu0 %1366
    %v1369 = vsel %vm830, %v1367, 0.0
    %1370 = vst.msk [vmem:[#allocation14 + $0xa] sm:$0x3] %vm444, %v1369
    %v1372 = vrot.slane %v1363, 4
    %v1374 = vsel %vm818, %v1372, 0.0
    %1375 = vst.msk [vmem:[#allocation15 + $0x4] sm:$0x3] %vm444, %v1374
    %1376 = vrot.lane.b32.xlu0 %v1194, 96
    %v1377 = vpop.permute.xlu0 %1376
    %v1379 = vsel %vm830, %v1367, %v1377
    %v1380 = vsel %vm818, %v1372, %v1195
    %v1381 = vpack.c.bf16 %v1379, %v1379
    %v1383 = vsel %vm178, %v1381, 0
    %1385 = vmatprep.subr.bf16.mxu0 0
    %1386 = vmatpush1.bf16.msra.mxu0 %v252
    %1387 = vmatprep.subr.bf16.mxu0 0
    %1388 = vmatpush1.bf16.msra.mxu0 %v253
    %1389 = vmatprep.subr.bf16.mxu0 0
    %1390 = vmatpush1.bf16.msra.mxu0 0
    %1391 = vmatprep.subr.bf16.mxu0 0
    %1392 = vmatpush1.bf16.msra.mxu0 0
    %1393 = vmatprep.subr.bf16.mxu0 0
    %1394 = vmatpush1.bf16.msra.mxu0 0
    %1395 = vmatprep.subr.bf16.mxu0 0
    %1396 = vmatpush1.bf16.msra.mxu0 0
    %1397 = vmatprep.subr.bf16.mxu0 0
    %1398 = vmatpush1.bf16.msra.mxu0 0
    %1399 = vmatprep.subr.bf16.mxu0 0
    %1400 = vmatpush1.bf16.msra.mxu0 0
    %1401 = vmatprep.subr.bf16.mxu0 0
    %1402 = vmatpush1.bf16.msra.mxu0 0
    %1403 = vmatprep.subr.bf16.mxu0 0
    %1404 = vmatpush1.bf16.msra.mxu0 0
    %1405 = vmatprep.subr.bf16.mxu0 0
    %1406 = vmatpush1.bf16.msra.mxu0 0
    %1407 = vmatprep.subr.bf16.mxu0 0
    %1408 = vmatpush1.bf16.msra.mxu0 0
    %1409 = vmatprep.subr.bf16.mxu0 0
    %1410 = vmatpush1.bf16.msra.mxu0 0
    %1411 = vmatprep.subr.bf16.mxu0 0
    %1412 = vmatpush1.bf16.msra.mxu0 0
    %1413 = vmatprep.subr.bf16.mxu0 0
    %1414 = vmatpush1.bf16.msra.mxu0 0
    %1415 = vmatprep.subr.bf16.mxu0 0
    %1416 = vmatpush1.bf16.msra.mxu0 0
    %1417 = vmatprep.mubr.bf16.mxu0 0
    %1418 = vmatmul.mubr.bf16.gmra.mrb[0].mxu0 %v1383
    %v1419 = vpop.f32.mrb[0].mxu0
    %v1420 = vadd.f32 0.0, %v1419
    %v1421 = vpop.f32.mrb[0].mxu0
    %v1422 = vpop.f32.mrb[0].mxu0
    %v1423 = vpop.f32.mrb[0].mxu0
    %1424 = vdwg.mxu0
    %v1426 = vrot.slane %v1420, 4
    %v1428 = vadd.f32 %v221, %v1426
    %v1429 = vxor.u32 %v1428, 2147483648
    %v1430 = vmul.f32 %v1429, 1.442695
    %v1431 = vpow.pop %v1430
    %v1432 = vadd.f32 %v1431, 1.0
    %v1433 = vrcp.pop %v1432
    %v1434 = vmul.f32 1.0, %v1433
    %v1435 = vadd.f32 %v1420, %v312
    %v1437 = vrot.slane %v1435, 4
    %1438 = vrot.lane.b32.xlu0 %v1437, 64
    %v1439 = vpop.permute.xlu0 %1438
    %v1441 = vmul.f32 %v1434, %v1439
    %1443 = vrot.lane.b32.xlu0 %v1441, 64
    %v1444 = vpop.permute.xlu0 %1443
    %v1446 = vadd.f32 %v221, %v1444
    %v1447 = vtanh.pop %v1446
    %v1448 = vsub.f32 1.0, %v1434
    %1450 = vrot.lane.b32.xlu0 %v1447, 96
    %v1451 = vpop.permute.xlu0 %1450
    %v1453 = vmul.f32 %v1448, %v1451
    %v1455 = vrot.slane %v1379, 4
    %1456 = vrot.lane.b32.xlu0 %v1455, 32
    %v1457 = vpop.permute.xlu0 %1456
    %v1459 = vmul.f32 %v1434, %v1457
    %v1460 = vadd.f32 %v1453, %v1459
    %v1461 = vpack.c.bf16 %v1380, %v1380
    %v1463 = vsel %vm178, %v1461, 0
    %1465 = vmatprep.subr.bf16.mxu0 0
    %1466 = vmatpush1.bf16.msra.mxu0 %v342
    %1467 = vmatprep.subr.bf16.mxu0 0
    %1468 = vmatpush1.bf16.msra.mxu0 %v343
    %1469 = vmatprep.subr.bf16.mxu0 0
    %1470 = vmatpush1.bf16.msra.mxu0 0
    %1471 = vmatprep.subr.bf16.mxu0 0
    %1472 = vmatpush1.bf16.msra.mxu0 0
    %1473 = vmatprep.subr.bf16.mxu0 0
    %1474 = vmatpush1.bf16.msra.mxu0 0
    %1475 = vmatprep.subr.bf16.mxu0 0
    %1476 = vmatpush1.bf16.msra.mxu0 0
    %1477 = vmatprep.subr.bf16.mxu0 0
    %1478 = vmatpush1.bf16.msra.mxu0 0
    %1479 = vmatprep.subr.bf16.mxu0 0
    %1480 = vmatpush1.bf16.msra.mxu0 0
    %1481 = vmatprep.subr.bf16.mxu0 0
    %1482 = vmatpush1.bf16.msra.mxu0 0
    %1483 = vmatprep.subr.bf16.mxu0 0
    %1484 = vmatpush1.bf16.msra.mxu0 0
    %1485 = vmatprep.subr.bf16.mxu0 0
    %1486 = vmatpush1.bf16.msra.mxu0 0
    %1487 = vmatprep.subr.bf16.mxu0 0
    %1488 = vmatpush1.bf16.msra.mxu0 0
    %1489 = vmatprep.subr.bf16.mxu0 0
    %1490 = vmatpush1.bf16.msra.mxu0 0
    %1491 = vmatprep.subr.bf16.mxu0 0
    %1492 = vmatpush1.bf16.msra.mxu0 0
    %1493 = vmatprep.subr.bf16.mxu0 0
    %1494 = vmatpush1.bf16.msra.mxu0 0
    %1495 = vmatprep.subr.bf16.mxu0 0
    %1496 = vmatpush1.bf16.msra.mxu0 0
    %1497 = vmatprep.mubr.bf16.mxu0 0
    %1498 = vmatmul.mubr.bf16.gmra.mrb[0].mxu0 %v1463
    %v1499 = vpop.f32.mrb[0].mxu0
    %v1500 = vadd.f32 0.0, %v1499
    %v1501 = vpop.f32.mrb[0].mxu0
    %v1502 = vpop.f32.mrb[0].mxu0
    %v1503 = vpop.f32.mrb[0].mxu0
    %1504 = vdwg.mxu0
    %v1506 = vrot.slane %v1500, 6
    %1507 = vrot.lane.b32.xlu0 %v1506, 96
    %v1508 = vpop.permute.xlu0 %1507
    %v1510 = vadd.f32 %v217, %v1508
    %v1511 = vxor.u32 %v1510, 2147483648
    %v1512 = vmul.f32 %v1511, 1.442695
    %v1513 = vpow.pop %v1512
    %v1514 = vadd.f32 %v1513, 1.0
    %v1515 = vrcp.pop %v1514
    %v1516 = vmul.f32 1.0, %v1515
    %v1517 = vadd.f32 %v219, %v1508
    %v1518 = vxor.u32 %v1517, 2147483648
    %v1519 = vmul.f32 %v1518, 1.442695
    %v1520 = vpow.pop %v1519
    %v1521 = vadd.f32 %v1520, 1.0
    %v1522 = vrcp.pop %v1521
    %v1523 = vmul.f32 1.0, %v1522
    %v1524 = vadd.f32 %v1500, %v411
    %v1526 = vrot.slane %v1524, 6
    %1527 = vrot.lane.b32.xlu0 %v1526, 32
    %v1528 = vpop.permute.xlu0 %1527
    %v1530 = vmul.f32 %v1516, %v1528
    %1532 = vrot.lane.b32.xlu0 %v1530, 64
    %v1533 = vpop.permute.xlu0 %1532
    %v1535 = vadd.f32 %v219, %v1533
    %v1536 = vtanh.pop %v1535
    %v1537 = vsub.f32 1.0, %v1523
    %1539 = vrot.lane.b32.xlu0 %v1536, 96
    %v1540 = vpop.permute.xlu0 %1539
    %v1542 = vmul.f32 %v1537, %v1540
    %v1544 = vrot.slane %v1380, 6
    %v1546 = vmul.f32 %v1523, %v1544
    %v1547 = vadd.f32 %v1542, %v1546
    %v1549 = vrot.slane %v1460, 4
    %1550 = vrot.lane.b32.xlu0 %v1549, 96
    %v1551 = vpop.permute.xlu0 %1550
    %v1553 = vsel %vm639, %v1551, 0.0
    %1554 = vst.msk [vmem:[#allocation14 + $0xc] sm:$0x3] %vm444, %v1553
    %v1556 = vrot.slane %v1547, 2
    %v1558 = vsel %vm627, %v1556, 0.0
    %1559 = vst.msk [vmem:[#allocation15 + $0x2] sm:$0x3] %vm444, %v1558
    %v1560 = vsel %vm639, %v1551, %v1379
    %v1561 = vsel %vm627, %v1556, %v1380
    %v1562 = vpack.c.bf16 %v1560, %v1560
    %v1564 = vsel %vm178, %v1562, 0
    %1566 = vmatprep.subr.bf16.mxu0 0
    %1567 = vmatpush1.bf16.msra.mxu0 %v252
    %1568 = vmatprep.subr.bf16.mxu0 0
    %1569 = vmatpush1.bf16.msra.mxu0 %v253
    %1570 = vmatprep.subr.bf16.mxu0 0
    %1571 = vmatpush1.bf16.msra.mxu0 0
    %1572 = vmatprep.subr.bf16.mxu0 0
    %1573 = vmatpush1.bf16.msra.mxu0 0
    %1574 = vmatprep.subr.bf16.mxu0 0
    %1575 = vmatpush1.bf16.msra.mxu0 0
    %1576 = vmatprep.subr.bf16.mxu0 0
    %1577 = vmatpush1.bf16.msra.mxu0 0
    %1578 = vmatprep.subr.bf16.mxu0 0
    %1579 = vmatpush1.bf16.msra.mxu0 0
    %1580 = vmatprep.subr.bf16.mxu0 0
    %1581 = vmatpush1.bf16.msra.mxu0 0
    %1582 = vmatprep.subr.bf16.mxu0 0
    %1583 = vmatpush1.bf16.msra.mxu0 0
    %1584 = vmatprep.subr.bf16.mxu0 0
    %1585 = vmatpush1.bf16.msra.mxu0 0
    %1586 = vmatprep.subr.bf16.mxu0 0
    %1587 = vmatpush1.bf16.msra.mxu0 0
    %1588 = vmatprep.subr.bf16.mxu0 0
    %1589 = vmatpush1.bf16.msra.mxu0 0
    %1590 = vmatprep.subr.bf16.mxu0 0
    %1591 = vmatpush1.bf16.msra.mxu0 0
    %1592 = vmatprep.subr.bf16.mxu0 0
    %1593 = vmatpush1.bf16.msra.mxu0 0
    %1594 = vmatprep.subr.bf16.mxu0 0
    %1595 = vmatpush1.bf16.msra.mxu0 0
    %1596 = vmatprep.subr.bf16.mxu0 0
    %1597 = vmatpush1.bf16.msra.mxu0 0
    %1598 = vmatprep.mubr.bf16.mxu0 0
    %1599 = vmatmul.mubr.bf16.gmra.mrb[0].mxu0 %v1564
    %v1600 = vpop.f32.mrb[0].mxu0
    %v1601 = vadd.f32 0.0, %v1600
    %v1602 = vpop.f32.mrb[0].mxu0
    %v1603 = vpop.f32.mrb[0].mxu0
    %v1604 = vpop.f32.mrb[0].mxu0
    %1605 = vdwg.mxu0
    %v1607 = vrot.slane %v1601, 2
    %v1609 = vadd.f32 %v221, %v1607
    %v1610 = vxor.u32 %v1609, 2147483648
    %v1611 = vmul.f32 %v1610, 1.442695
    %v1612 = vpow.pop %v1611
    %v1613 = vadd.f32 %v1612, 1.0
    %v1614 = vrcp.pop %v1613
    %v1615 = vmul.f32 1.0, %v1614
    %v1616 = vadd.f32 %v1601, %v312
    %v1618 = vrot.slane %v1616, 2
    %1619 = vrot.lane.b32.xlu0 %v1618, 64
    %v1620 = vpop.permute.xlu0 %1619
    %v1622 = vmul.f32 %v1615, %v1620
    %1624 = vrot.lane.b32.xlu0 %v1622, 64
    %v1625 = vpop.permute.xlu0 %1624
    %v1627 = vadd.f32 %v221, %v1625
    %v1628 = vtanh.pop %v1627
    %v1629 = vsub.f32 1.0, %v1615
    %1631 = vrot.lane.b32.xlu0 %v1628, 96
    %v1632 = vpop.permute.xlu0 %1631
    %v1634 = vmul.f32 %v1629, %v1632
    %v1636 = vrot.slane %v1560, 2
    %1637 = vrot.lane.b32.xlu0 %v1636, 32
    %v1638 = vpop.permute.xlu0 %1637
    %v1640 = vmul.f32 %v1615, %v1638
    %v1641 = vadd.f32 %v1634, %v1640
    %v1642 = vpack.c.bf16 %v1561, %v1561
    %v1644 = vsel %vm178, %v1642, 0
    %1646 = vmatprep.subr.bf16.mxu0 0
    %1647 = vmatpush1.bf16.msra.mxu0 %v342
    %1648 = vmatprep.subr.bf16.mxu0 0
    %1649 = vmatpush1.bf16.msra.mxu0 %v343
    %1650 = vmatprep.subr.bf16.mxu0 0
    %1651 = vmatpush1.bf16.msra.mxu0 0
    %1652 = vmatprep.subr.bf16.mxu0 0
    %1653 = vmatpush1.bf16.msra.mxu0 0
    %1654 = vmatprep.subr.bf16.mxu0 0
    %1655 = vmatpush1.bf16.msra.mxu0 0
    %1656 = vmatprep.subr.bf16.mxu0 0
    %1657 = vmatpush1.bf16.msra.mxu0 0
    %1658 = vmatprep.subr.bf16.mxu0 0
    %1659 = vmatpush1.bf16.msra.mxu0 0
    %1660 = vmatprep.subr.bf16.mxu0 0
    %1661 = vmatpush1.bf16.msra.mxu0 0
    %1662 = vmatprep.subr.bf16.mxu0 0
    %1663 = vmatpush1.bf16.msra.mxu0 0
    %1664 = vmatprep.subr.bf16.mxu0 0
    %1665 = vmatpush1.bf16.msra.mxu0 0
    %1666 = vmatprep.subr.bf16.mxu0 0
    %1667 = vmatpush1.bf16.msra.mxu0 0
    %1668 = vmatprep.subr.bf16.mxu0 0
    %1669 = vmatpush1.bf16.msra.mxu0 0
    %1670 = vmatprep.subr.bf16.mxu0 0
    %1671 = vmatpush1.bf16.msra.mxu0 0
    %1672 = vmatprep.subr.bf16.mxu0 0
    %1673 = vmatpush1.bf16.msra.mxu0 0
    %1674 = vmatprep.subr.bf16.mxu0 0
    %1675 = vmatpush1.bf16.msra.mxu0 0
    %1676 = vmatprep.subr.bf16.mxu0 0
    %1677 = vmatpush1.bf16.msra.mxu0 0
    %1678 = vmatprep.mubr.bf16.mxu0 0
    %1679 = vmatmul.mubr.bf16.gmra.mrb[0].mxu0 %v1644
    %v1680 = vpop.f32.mrb[0].mxu0
    %v1681 = vadd.f32 0.0, %v1680
    %v1682 = vpop.f32.mrb[0].mxu0
    %v1683 = vpop.f32.mrb[0].mxu0
    %v1684 = vpop.f32.mrb[0].mxu0
    %1685 = vdwg.mxu0
    %1687 = vrot.lane.b32.xlu0 %v1681, 96
    %v1688 = vpop.permute.xlu0 %1687
    %v1690 = vadd.f32 %v217, %v1688
    %v1691 = vxor.u32 %v1690, 2147483648
    %v1692 = vmul.f32 %v1691, 1.442695
    %v1693 = vpow.pop %v1692
    %v1694 = vadd.f32 %v1693, 1.0
    %v1695 = vrcp.pop %v1694
    %v1696 = vmul.f32 1.0, %v1695
    %v1697 = vadd.f32 %v219, %v1688
    %v1698 = vxor.u32 %v1697, 2147483648
    %v1699 = vmul.f32 %v1698, 1.442695
    %v1700 = vpow.pop %v1699
    %v1701 = vadd.f32 %v1700, 1.0
    %v1702 = vrcp.pop %v1701
    %v1703 = vmul.f32 1.0, %v1702
    %v1704 = vadd.f32 %v1681, %v411
    %1706 = vrot.lane.b32.xlu0 %v1704, 32
    %v1707 = vpop.permute.xlu0 %1706
    %v1709 = vmul.f32 %v1696, %v1707
    %1711 = vrot.lane.b32.xlu0 %v1709, 64
    %v1712 = vpop.permute.xlu0 %1711
    %v1714 = vadd.f32 %v219, %v1712
    %v1715 = vtanh.pop %v1714
    %v1716 = vsub.f32 1.0, %v1703
    %1718 = vrot.lane.b32.xlu0 %v1715, 96
    %v1719 = vpop.permute.xlu0 %1718
    %v1721 = vmul.f32 %v1716, %v1719
    %v1722 = vmul.f32 %v1703, %v1561
    %v1723 = vadd.f32 %v1721, %v1722
    %v1725 = vrot.slane %v1641, 6
    %1726 = vrot.lane.b32.xlu0 %v1725, 96
    %v1727 = vpop.permute.xlu0 %1726
    %v1729 = vsel %vm450, %v1727, 0.0
    %1730 = vst.msk [vmem:[#allocation14 + $0xe] sm:$0x3] %vm444, %v1729
    %v1731 = vsel %vm438, %v1723, 0.0
    %1732 = vst.msk [vmem:[#allocation15] sm:$0x3] %vm444, %v1731
    %v1733 = vsel %vm450, %v1727, %v1560
    %v1734 = vsel %vm438, %v1723, %v1561
    %v1735 = vld [vmem:[%s8] sm:$0xff]
    %v1736 = vld [vmem:[%s8 + $0x8] sm:$0xff]
    %v1737 = vld [vmem:[%s8 + $0x10] sm:$0xff]
    %v1738 = vld [vmem:[%s8 + $0x18] sm:$0xff]
    %v1739 = vld [vmem:[#allocation13] sm:$0xff]
    %v1740 = vld [vmem:[#allocation13 + $0x8] sm:$0xff]
    %v1741 = vld [vmem:[#allocation13 + $0x10] sm:$0xff]
    %v1742 = vld [vmem:[#allocation13 + $0x18] sm:$0xff]
    %v1744 = vsel %vm178, %v1734, 0
    %1746 = vmatprep.subr.mxu0 0.0
    %1747 = vmatpush1.msra.mxu0 %v1739
    %1748 = vmatprep.subr.mxu0 0.0
    %1749 = vmatpush1.msra.mxu0 %v1740
    %1750 = vmatprep.subr.mxu0 0.0
    %1751 = vmatpush1.msra.mxu0 %v1741
    %1752 = vmatprep.subr.mxu0 0.0
    %1753 = vmatpush1.msra.mxu0 %v1742
    %1754 = vmatprep.subr.mxu0 0.0
    %1755 = vmatpush1.msra.mxu0 0.0
    %1756 = vmatprep.subr.mxu0 0.0
    %1757 = vmatpush1.msra.mxu0 0.0
    %1758 = vmatprep.subr.mxu0 0.0
    %1759 = vmatpush1.msra.mxu0 0.0
    %1760 = vmatprep.subr.mxu0 0.0
    %1761 = vmatpush1.msra.mxu0 0.0
    %1762 = vmatprep.subr.mxu0 0.0
    %1763 = vmatpush1.msra.mxu0 0.0
    %1764 = vmatprep.subr.mxu0 0.0
    %1765 = vmatpush1.msra.mxu0 0.0
    %1766 = vmatprep.subr.mxu0 0.0
    %1767 = vmatpush1.msra.mxu0 0.0
    %1768 = vmatprep.subr.mxu0 0.0
    %1769 = vmatpush1.msra.mxu0 0.0
    %1770 = vmatprep.subr.mxu0 0.0
    %1771 = vmatpush1.msra.mxu0 0.0
    %1772 = vmatprep.subr.mxu0 0.0
    %1773 = vmatpush1.msra.mxu0 0.0
    %1774 = vmatprep.subr.mxu0 0.0
    %1775 = vmatpush1.msra.mxu0 0.0
    %1776 = vmatprep.subr.mxu0 0.0
    %1777 = vmatpush1.msra.mxu0 0.0
    %1778 = vmatprep.subr.mxu0 0.0
    %1779 = vmatpush1.msra.mxu0 0.0
    %1780 = vmatprep.subr.mxu0 0.0
    %1781 = vmatpush1.msra.mxu0 0.0
    %1782 = vmatprep.subr.mxu0 0.0
    %1783 = vmatpush1.msra.mxu0 0.0
    %1784 = vmatprep.subr.mxu0 0.0
    %1785 = vmatpush1.msra.mxu0 0.0
    %1786 = vmatprep.subr.mxu0 0.0
    %1787 = vmatpush1.msra.mxu0 0.0
    %1788 = vmatprep.subr.mxu0 0.0
    %1789 = vmatpush1.msra.mxu0 0.0
    %1790 = vmatprep.subr.mxu0 0.0
    %1791 = vmatpush1.msra.mxu0 0.0
    %1792 = vmatprep.subr.mxu0 0.0
    %1793 = vmatpush1.msra.mxu0 0.0
    %1794 = vmatprep.subr.mxu0 0.0
    %1795 = vmatpush1.msra.mxu0 0.0
    %1796 = vmatprep.subr.mxu0 0.0
    %1797 = vmatpush1.msra.mxu0 0.0
    %1798 = vmatprep.subr.mxu0 0.0
    %1799 = vmatpush1.msra.mxu0 0.0
    %1800 = vmatprep.subr.mxu0 0.0
    %1801 = vmatpush1.msra.mxu0 0.0
    %1802 = vmatprep.subr.mxu0 0.0
    %1803 = vmatpush1.msra.mxu0 0.0
    %1804 = vmatprep.subr.mxu0 0.0
    %1805 = vmatpush1.msra.mxu0 0.0
    %1806 = vmatprep.subr.mxu0 0.0
    %1807 = vmatpush1.msra.mxu0 0.0
    %1808 = vmatprep.subr.mxu0 0.0
    %1809 = vmatpush1.msra.mxu0 0.0
    %1810 = vmatprep.mubr.f32.mxu0 0.0
    %1811 = vmatmul.mubr.f32.gmra.mrb[0].mxu0 %v1744
    %v1812 = vpop.f32.mrb[0].mxu0
    %v1813 = vadd.f32 0.0, %v1812
    %v1814 = vpop.f32.mrb[0].mxu0
    %1815 = vdwg.mxu0
    %v1817 = vsel %vm178, %v1733, 0
    %1819 = vmatprep.subr.mxu0 0.0
    %1820 = vmatpush1.msra.mxu0 %v1735
    %1821 = vmatprep.subr.mxu0 0.0
    %1822 = vmatpush1.msra.mxu0 %v1736
    %1823 = vmatprep.subr.mxu0 0.0
    %1824 = vmatpush1.msra.mxu0 %v1737
    %1825 = vmatprep.subr.mxu0 0.0
    %1826 = vmatpush1.msra.mxu0 %v1738
    %1827 = vmatprep.subr.mxu0 0.0
    %1828 = vmatpush1.msra.mxu0 0.0
    %1829 = vmatprep.subr.mxu0 0.0
    %1830 = vmatpush1.msra.mxu0 0.0
    %1831 = vmatprep.subr.mxu0 0.0
    %1832 = vmatpush1.msra.mxu0 0.0
    %1833 = vmatprep.subr.mxu0 0.0
    %1834 = vmatpush1.msra.mxu0 0.0
    %1835 = vmatprep.subr.mxu0 0.0
    %1836 = vmatpush1.msra.mxu0 0.0
    %1837 = vmatprep.subr.mxu0 0.0
    %1838 = vmatpush1.msra.mxu0 0.0
    %1839 = vmatprep.subr.mxu0 0.0
    %1840 = vmatpush1.msra.mxu0 0.0
    %1841 = vmatprep.subr.mxu0 0.0
    %1842 = vmatpush1.msra.mxu0 0.0
    %1843 = vmatprep.subr.mxu0 0.0
    %1844 = vmatpush1.msra.mxu0 0.0
    %1845 = vmatprep.subr.mxu0 0.0
    %1846 = vmatpush1.msra.mxu0 0.0
    %1847 = vmatprep.subr.mxu0 0.0
    %1848 = vmatpush1.msra.mxu0 0.0
    %1849 = vmatprep.subr.mxu0 0.0
    %1850 = vmatpush1.msra.mxu0 0.0
    %1851 = vmatprep.subr.mxu0 0.0
    %1852 = vmatpush1.msra.mxu0 0.0
    %1853 = vmatprep.subr.mxu0 0.0
    %1854 = vmatpush1.msra.mxu0 0.0
    %1855 = vmatprep.subr.mxu0 0.0
    %1856 = vmatpush1.msra.mxu0 0.0
    %1857 = vmatprep.subr.mxu0 0.0
    %1858 = vmatpush1.msra.mxu0 0.0
    %1859 = vmatprep.subr.mxu0 0.0
    %1860 = vmatpush1.msra.mxu0 0.0
    %1861 = vmatprep.subr.mxu0 0.0
    %1862 = vmatpush1.msra.mxu0 0.0
    %1863 = vmatprep.subr.mxu0 0.0
    %1864 = vmatpush1.msra.mxu0 0.0
    %1865 = vmatprep.subr.mxu0 0.0
    %1866 = vmatpush1.msra.mxu0 0.0
    %1867 = vmatprep.subr.mxu0 0.0
    %1868 = vmatpush1.msra.mxu0 0.0
    %1869 = vmatprep.subr.mxu0 0.0
    %1870 = vmatpush1.msra.mxu0 0.0
    %1871 = vmatprep.subr.mxu0 0.0
    %1872 = vmatpush1.msra.mxu0 0.0
    %1873 = vmatprep.subr.mxu0 0.0
    %1874 = vmatpush1.msra.mxu0 0.0
    %1875 = vmatprep.subr.mxu0 0.0
    %1876 = vmatpush1.msra.mxu0 0.0
    %1877 = vmatprep.subr.mxu0 0.0
    %1878 = vmatpush1.msra.mxu0 0.0
    %1879 = vmatprep.subr.mxu0 0.0
    %1880 = vmatpush1.msra.mxu0 0.0
    %1881 = vmatprep.subr.mxu0 0.0
    %1882 = vmatpush1.msra.mxu0 0.0
    %1883 = vmatprep.mubr.f32.mxu0 0.0
    %1884 = vmatmul.mubr.f32.gmra.mrb[0].mxu0 %v1817
    %v1885 = vpop.f32.mrb[0].mxu0
    %v1886 = vadd.f32 %v1813, %v1885
    %v1887 = vpop.f32.mrb[0].mxu0
    %1888 = vdwg.mxu0
    %v1889 = vld [vmem:[%s10] sm:$0x1]
    %v1891 = vlaneseq
    %v1892 = vshrl.u32 %v1891, 7
    %v1893 = vsub.s32 0, %v1892
    %v1894 = vrot.slane %v1889, %v1893
    %v1896 = vadd.f32 %v1886, %v1894
    %v1897 = vtanh.pop %v1896
    %1898 = vst.msk [vmem:[#allocation17] sm:$0x3] %vm444, %v1897
    // Predicated region
    $region74: #{tpu_custom_call.1} parent=1 // pred_check
      _
    $region75: #{tpu_custom_call.1} parent=1 // pred_check_branch
      %1900 = sbr.rel (0) target = $region77
    $region76: #{tpu_custom_call.1} parent=1 // pred_region
      %s1902 = ssub.s32 256, 256
      %1903 = vsyncadd [#allocation4], %s1902
      %s1904 = sshll.u32 [#allocation14], 4
      %s1905 = int_to_ptr.vmem [resolvable:$true] %s1904
      %1910 = dma.vmem_to_hbm [thread:$0]  %s1905, 256, %s11, [#allocation4], 128, 128, 8
    $region77: #{tpu_custom_call.1} parent=1 // pred_fallthru
      _
    // Predicated region
    $region78: #{tpu_custom_call.1} parent=1 // pred_check
      _
    $region79: #{tpu_custom_call.1} parent=1 // pred_check_branch
      %1912 = sbr.rel (0) target = $region81
    $region80: #{tpu_custom_call.1} parent=1 // pred_region
      %s1914 = ssub.s32 256, 256
      %1915 = vsyncadd [#allocation16], %s1914
      %s1916 = sshll.u32 [#allocation15], 4
      %s1917 = int_to_ptr.vmem [resolvable:$true] %s1916
      %1922 = dma.vmem_to_hbm [thread:$0]  %s1917, 256, %s12, [#allocation16], 128, 128, 8
    $region81: #{tpu_custom_call.1} parent=1 // pred_fallthru
      _
    // Predicated region
    $region82: #{tpu_custom_call.1} parent=1 // pred_check
      _
    $region83: #{tpu_custom_call.1} parent=1 // pred_check_branch
      %1924 = sbr.rel (0) target = $region85
    $region84: #{tpu_custom_call.1} parent=1 // pred_region
      %s1926 = ssub.s32 32, 32
      %1927 = vsyncadd [#allocation16], %s1926
      %s1929 = sshll.u32 [#allocation17], 4
      %s1930 = int_to_ptr.vmem [resolvable:$true] %s1929
      %1932 = dma.vmem_to_hbm [thread:$0]  %s1930, 32, %s13, [#allocation16]
    $region85: #{tpu_custom_call.1} parent=1 // pred_fallthru
      _
    // Predicated region
    $region86: #{tpu_custom_call.1} parent=1 // pred_check
      _
    $region87: #{tpu_custom_call.1} parent=1 // pred_check_branch
      %1934 = sbr.rel (0) target = $region89
    $region88: #{tpu_custom_call.1} parent=1 // pred_region
      %1935 = dma.done [#allocation4], 256
    $region89: #{tpu_custom_call.1} parent=1 // pred_fallthru
      _
    // Predicated region
    $region90: #{tpu_custom_call.1} parent=1 // pred_check
      _
    $region91: #{tpu_custom_call.1} parent=1 // pred_check_branch
      %1937 = sbr.rel (0) target = $region93
    $region92: #{tpu_custom_call.1} parent=1 // pred_region
      %1938 = dma.done [#allocation16], 256
    $region93: #{tpu_custom_call.1} parent=1 // pred_fallthru
      _
    // Predicated region
    $region94: #{tpu_custom_call.1} parent=1 // pred_check
      _
    $region95: #{tpu_custom_call.1} parent=1 // pred_check_branch
      %1940 = sbr.rel (0) target = $region97
    $region96: #{tpu_custom_call.1} parent=1 // pred_region
      %1941 = dma.done [#allocation16], 32
    $region97: #{tpu_custom_call.1} parent=1 // pred_fallthru
      _
    %1942 = vsyncpa [#allocation3], 1
    %1943 = vsyncpa [#allocation6], 1
    %1944 = vsyncpa [#allocation9], 1
    %1945 = vsyncpa [#allocation12], 1
    %1946 = vsyncpa [#allocation4], 1
    %1947 = vsyncpa [#allocation16], 1

</llo_original>
